<compile_context>
chip_gen: v6e
topology: v6e:2x2x1
jax: 0.10.0
libtpu: 0.0.40
codegen_flags: <defaults>
</compile_context>

<pallas_src>
import functools

import jax
import jax.numpy as jnp
from jax.experimental import pallas as pl
from jax.experimental.pallas import tpu as pltpu


def _round_up(x, m):
    return (x + m - 1) // m * m


def _cparams(sems):
    # <= 48 MiB: safe on v5e/v6e (128 MiB) and v7x (64 MiB physical VMEM).
    return pltpu.CompilerParams(dimension_semantics=sems,
                                vmem_limit_bytes=48 * 1024 * 1024)


# --------------------------- generic MXU matmul ------------------------------

def _mm_kernel(a_ref, b_ref, bias_ref, o_ref, acc_ref):
    @pl.when(pl.program_id(2) == 0)
    def _():
        acc_ref[...] = jnp.zeros_like(acc_ref)

    acc_ref[...] += jnp.dot(a_ref[...].astype(jnp.bfloat16), b_ref[...],
                            preferred_element_type=jnp.float32)

    @pl.when(pl.program_id(2) == pl.num_programs(2) - 1)
    def _():
        o_ref[...] = acc_ref[...] + bias_ref[...]


def _choose_tile(dim, cap, align):
    """Pick a block size for `dim`: full dim if small, else an aligned divisor,
    else (rare, never hit by this network) pad up."""
    if dim <= cap:
        return dim, dim
    t = (cap // align) * align
    while t >= align:
        if dim % t == 0:
            return t, dim
        t -= align
    base = (cap // align) * align
    return base, _round_up(dim, base)


def pallas_matmul(a, b, bias=None):
    """(M, K) @ (K, N) (+ bias) -> (M, N) f32.  bf16 MXU operands, f32 acc."""
    M, K = a.shape
    K2, N = b.shape
    assert K == K2
    a = a.astype(jnp.float32)
    b = b.astype(jnp.bfloat16)

    tm, Mp = _choose_tile(M, 512, 8)
    tn, Np = _choose_tile(N, 256, 128)
    if K <= 8192:
        tk, Kp = K, K                      # single full-K block, no padding
    else:
        tk, Kp = _choose_tile(K, 4096, 128)

    if Mp != M or Kp != K:
        a = jnp.pad(a, ((0, Mp - M), (0, Kp - K)))
    if Kp != K or Np != N:
        b = jnp.pad(b, ((0, Kp - K), (0, Np - N)))
    if bias is None:
        bias_row = jnp.zeros((1, Np), jnp.float32)
    else:
        bias_row = jnp.pad(bias.astype(jnp.float32).reshape(1, N),
                           ((0, 0), (0, Np - N)))

    out = pl.pallas_call(
        _mm_kernel,
        out_shape=jax.ShapeDtypeStruct((Mp, Np), jnp.float32),
        grid_spec=pltpu.PrefetchScalarGridSpec(
            num_scalar_prefetch=0,
            grid=(Mp // tm, Np // tn, Kp // tk),
            in_specs=[pl.BlockSpec((tm, tk), lambda i, j, k: (i, k)),
                      pl.BlockSpec((tk, tn), lambda i, j, k: (k, j)),
                      pl.BlockSpec((1, tn), lambda i, j, k: (0, j))],
            out_specs=pl.BlockSpec((tm, tn), lambda i, j, k: (i, j)),
            scratch_shapes=[pltpu.VMEM((tm, tn), jnp.float32)]),
        compiler_params=_cparams(("parallel", "parallel", "arbitrary")),
    )(a, b, bias_row)
    if Mp != M or Np != N:
        out = out[:M, :N]
    return out


# --------------------- direct 3x3x3 conv (no im2col) -------------------------

def _conv3x3x3_kernel(x0_ref, x1_ref, x2_ref, w_ref, o_ref, *, H, W):
    # x*_ref: (1, H+2, W+2, Cin) padded depth planes d, d+1, d+2 (f32)
    # w_ref : (27, Cin, Cout) bf16, tap index = kd*9 + kh*3 + kw
    # o_ref : (1, H*W, Cout) f32
    HW = H * W
    acc = None
    for kd, xr in enumerate((x0_ref, x1_ref, x2_ref)):
        for kw in range(3):
            win = xr[0, :, kw:kw + W, :]                      # (H+2, W, Cin)
            a = win.reshape((H + 2) * W, win.shape[-1]).astype(jnp.bfloat16)
            for kh in range(3):
                part = jnp.dot(a[kh * W:kh * W + HW, :],
                               w_ref[kd * 9 + kh * 3 + kw],
                               preferred_element_type=jnp.float32)
                acc = part if acc is None else acc + part
    o_ref[0] = acc


def _conv3d_3x3x3_direct(x, w):
    N, D, H, W, Cin = x.shape
    Cout = w.shape[0]
    HW = H * W
    xp = jnp.pad(x, ((0, 0), (1, 1), (1, 1), (1, 1), (0, 0)))
    xp = xp.reshape(N * (D + 2), H + 2, W + 2, Cin)
    wt = jnp.transpose(w, (2, 3, 4, 1, 0)).reshape(27, Cin, Cout)
    wt = wt.astype(jnp.bfloat16)

    def x_spec(kd):
        return pl.BlockSpec(
            (1, H + 2, W + 2, Cin),
            lambda m, _kd=kd: ((m // D) * (D + 2) + (m % D) + _kd, 0, 0, 0))

    kernel = functools.partial(_conv3x3x3_kernel, H=H, W=W)
    out = pl.pallas_call(
        kernel,
        out_shape=jax.ShapeDtypeStruct((N * D, HW, Cout), jnp.float32),
        grid=(N * D,),
        in_specs=[x_spec(0), x_spec(1), x_spec(2),
                  pl.BlockSpec((27, Cin, Cout), lambda m: (0, 0, 0))],
        out_specs=pl.BlockSpec((1, HW, Cout), lambda m: (m, 0, 0)),
        compiler_params=_cparams(("parallel",)),
    )(xp, xp, xp, wt)
    return out.reshape(N, D, H, W, Cout)


def _im2col_3x3x3(x):
    """Fallback (only used at tiny deep levels).  K ordering = (tap, Cin)."""
    N, D, H, W, C = x.shape
    xp = jnp.pad(x, ((0, 0), (1, 1), (1, 1), (1, 1), (0, 0)))
    cols = []
    for kd in range(3):
        for kh in range(3):
            for kw in range(3):
                cols.append(xp[:, kd:kd + D, kh:kh + H, kw:kw + W, :])
    p = jnp.stack(cols, axis=4)                  # (N, D, H, W, 27, C)
    return p.reshape(N, D * H * W, 27 * C)


def conv3d_3x3x3(x, w):
    """Conv3d k=3, stride=1, pad=1, no bias.  w: (Cout, Cin, 3, 3, 3)."""
    N, D, H, W, Cin = x.shape
    Cout = w.shape[0]
    if W % 8 == 0:
        try:
            return _conv3d_3x3x3_direct(x, w)
        except Exception:
            pass                                  # fall back to im2col below
    a = _im2col_3x3x3(x).reshape(N * D * H * W, Cin * 27)
    b = jnp.transpose(w.reshape(Cout, Cin, 27), (2, 1, 0)).reshape(27 * Cin, Cout)
    y = pallas_matmul(a, b)
    return y.reshape(N, D, H, W, Cout)


# --------------------------- other conv wrappers ------------------------------

def conv3d_1x1x1(x, w, bias=None):
    """Conv3d k=1 (bias optional, fused into the matmul epilogue)."""
    N, D, H, W, Cin = x.shape
    Cout = w.shape[0]
    y = pallas_matmul(x.reshape(N * D * H * W, Cin), w.reshape(Cout, Cin).T, bias)
    return y.reshape(N, D, H, W, Cout)


def convT3d_3x3x3(x, w):
    """ConvTranspose3d k=3, s=1, p=1 == conv with flipped, channel-swapped w."""
    w_conv = jnp.transpose(jnp.flip(w, axis=(2, 3, 4)), (1, 0, 2, 3, 4))
    return conv3d_3x3x3(x, w_conv)


def convT3d_2x2x2_s2(x, w):
    """ConvTranspose3d k=2, stride=2.  w: (Cin, Cout, 2, 2, 2)."""
    N, D, H, W, Cin = x.shape
    Cout = w.shape[1]
    y = pallas_matmul(x.reshape(N * D * H * W, Cin), w.reshape(Cin, Cout * 8))
    y = y.reshape(N, D, H, W, Cout, 2, 2, 2)
    # TODO(synk): fuse this pixel-shuffle into the matmul output index_map /
    # the following InstanceNorm read instead of a standalone XLA transpose.
    y = jnp.transpose(y, (0, 1, 5, 2, 6, 3, 7, 4))
    return y.reshape(N, 2 * D, 2 * H, 2 * W, Cout)


def convT3d_1x1x1(x, w, bias=None):
    """ConvTranspose3d k=1, s=1 (bias fused)."""
    N, D, H, W, Cin = x.shape
    Cout = w.shape[1]
    y = pallas_matmul(x.reshape(N * D * H * W, Cin), w.reshape(Cin, Cout), bias)
    return y.reshape(N, D, H, W, Cout)


# ----------------------- InstanceNorm3d + LeakyReLU --------------------------
# TODO(synk): the per-channel sum / sum-of-squares could additionally be
# produced in the conv matmul epilogue to save one read pass per activation.

def _in_lrelu_kernel(x_ref, o_ref, *, fold, s_total):
    x = x_ref[...]                                   # (1, SR, CB) f32
    lanes = x.shape[-1]
    c = lanes // fold

    def _fold_sum(v):                                # v: (1, 1, lanes)
        t = v
        for i in range(1, fold):
            t = t + pltpu.roll(v, shift=i * c, axis=2)
        return t

    mean = _fold_sum(jnp.sum(x, axis=1, keepdims=True)) / s_total
    d = x - mean
    var = _fold_sum(jnp.sum(d * d, axis=1, keepdims=True)) / s_total
    y = d * jax.lax.rsqrt(var + 1e-5)                # biased var (PyTorch IN)
    o_ref[...] = jnp.where(y >= 0, y, 0.01 * y)      # LeakyReLU(0.01)


def instnorm_lrelu(x):
    """InstanceNorm3d(affine=False, eps=1e-5) + LeakyReLU on (N, D, H, W, C)."""
    N, D, H, W, C = x.shape
    S = D * H * W

    def run(xv, cb, fold, cgrid):
        SR = xv.shape[1]
        kern = functools.partial(_in_lrelu_kernel, fold=fold, s_total=S)
        spec = pl.BlockSpec((1, SR, cb), lambda n, j: (n, 0, j))
        return pl.pallas_call(
            kern,
            out_shape=jax.ShapeDtypeStruct(xv.shape, jnp.float32),
            grid=(N, cgrid),
            in_specs=[spec],
            out_specs=spec,
            compiler_params=_cparams(("parallel", "parallel")),
        )(xv)

    try:
        if C % 128 == 0:
            out = run(x.reshape(N, S, C), 128, 1, C // 128)
        elif 128 % C == 0 and S % (128 // C) == 0:
            fold = 128 // C
            out = run(x.reshape(N, S // fold, 128), 128, fold, 1)
        else:
            out = run(x.reshape(N, S, C), C, 1, 1)
    except Exception:
        out = run(x.reshape(N, S, C), C, 1, 1)       # previously-validated path
    return out.reshape(N, D, H, W, C)


norm_act = instnorm_lrelu


# ------------------------------- MaxPool3d(2) --------------------------------

def _maxpool_kernel(x_ref, o_ref):
    x = x_ref[...]                                   # (1, 2, Hh, 2, Wh, 2, C)
    m = jnp.maximum(x[:, 0], x[:, 1])                # (1, Hh, 2, Wh, 2, C)
    m = jnp.maximum(m[:, :, 0], m[:, :, 1])          # (1, Hh, Wh, 2, C)
    o_ref[...] = jnp.max(m, axis=3)                  # (1, Hh, Wh, C)


def _maxpool_kernel_taps(*refs):                     # fallback: 8 ins + 1 out
    o_ref = refs[-1]
    m = refs[0][...]
    for r in refs[1:-1]:
        m = jnp.maximum(m, r[...])
    o_ref[...] = m


def maxpool3d_2(x):
    """MaxPool3d(kernel=2, stride=2) on channels-last (N, D, H, W, C)."""
    N, D, H, W, C = x.shape
    Dh, Hh, Wh = D // 2, H // 2, W // 2
    try:
        xv = x.reshape(N * Dh, 2, Hh, 2, Wh, 2, C)   # free reshape
        out = pl.pallas_call(
            _maxpool_kernel,
            out_shape=jax.ShapeDtypeStruct((N * Dh, Hh, Wh, C), jnp.float32),
            grid=(N * Dh,),
            in_specs=[pl.BlockSpec((1, 2, Hh, 2, Wh, 2, C),
                                   lambda m: (m, 0, 0, 0, 0, 0, 0))],
            out_specs=pl.BlockSpec((1, Hh, Wh, C), lambda m: (m, 0, 0, 0)),
            compiler_params=_cparams(("parallel",)),
        )(xv)
        return out.reshape(N, Dh, Hh, Wh, C)
    except Exception:
        Sp = Dh * Hh * Wh
        slices = [x[:, od::2, oh::2, ow::2, :].reshape(N, Sp, C)
                  for od in range(2) for oh in range(2) for ow in range(2)]
        spec = pl.BlockSpec((1, Sp, C), lambda n: (n, 0, 0))
        out = pl.pallas_call(
            _maxpool_kernel_taps,
            out_shape=jax.ShapeDtypeStruct((N, Sp, C), jnp.float32),
            grid=(N,),
            in_specs=[spec] * 8,
            out_specs=spec,
            compiler_params=_cparams(("arbitrary",)),
        )(*slices)
        return out.reshape(N, Dh, Hh, Wh, C)


# ------------------------------- model ---------------------------------------

def make_params(n_in, n_out, c=32):
    key = jax.random.PRNGKey(0)
    counter = [0]

    def w(shape, scale=0.05):
        counter[0] += 1
        return scale * jax.random.normal(
            jax.random.fold_in(key, counter[0]), shape, dtype=jnp.float32)

    p = {}
    # encoder: Conv3d weights (Cout, Cin, 3, 3, 3), bias=False
    p["ec0"] = w((c, n_in, 3, 3, 3))
    p["ec1"] = w((2 * c, c, 3, 3, 3))
    p["ec2"] = w((2 * c, 2 * c, 3, 3, 3))
    p["ec3"] = w((4 * c, 2 * c, 3, 3, 3))
    p["ec4"] = w((4 * c, 4 * c, 3, 3, 3))
    p["ec5"] = w((8 * c, 4 * c, 3, 3, 3))
    p["ec6"] = w((8 * c, 8 * c, 3, 3, 3))
    p["ec7"] = w((16 * c, 8 * c, 3, 3, 3))
    p["ec8"] = w((16 * c, 16 * c, 3, 3, 3))
    p["ec9"] = w((32 * c, 16 * c, 3, 3, 3))
    # bottleneck 1x1 Conv3d (bias=True by default)
    p["el_w"] = w((32 * c, 32 * c, 1, 1, 1))
    p["el_b"] = w((32 * c,))
    # decoder: ConvTranspose3d weights (Cin, Cout, k, k, k), bias=False
    p["dc12"] = w((32 * c, 32 * c, 2, 2, 2))
    p["dc11"] = w((32 * c + 16 * c, 16 * c, 3, 3, 3))
    p["dc10"] = w((16 * c, 16 * c, 3, 3, 3))
    p["dc9"] = w((16 * c, 16 * c, 2, 2, 2))
    p["dc8"] = w((16 * c + 8 * c, 8 * c, 3, 3, 3))
    p["dc7"] = w((8 * c, 8 * c, 3, 3, 3))
    p["dc6"] = w((8 * c, 8 * c, 2, 2, 2))
    p["dc5"] = w((8 * c + 4 * c, 4 * c, 3, 3, 3))
    p["dc4"] = w((4 * c, 4 * c, 3, 3, 3))
    p["dc3"] = w((4 * c, 4 * c, 2, 2, 2))
    p["dc2"] = w((4 * c + 2 * c, 2 * c, 3, 3, 3))
    p["dc1"] = w((2 * c, 2 * c, 3, 3, 3))
    p["dc0"] = w((2 * c, n_out, 1, 1, 1))
    # final 1x1 ConvTranspose3d (bias=True by default)
    p["dl_w"] = w((n_out, n_out, 1, 1, 1))
    p["dl_b"] = w((n_out,))
    return p


def deep_synbo_unet3d_forward(params, x_ncdhw):
    """x_ncdhw: (N, n_in, D, H, W), PyTorch layout.  Returns NCDHW output."""
    x = jnp.transpose(x_ncdhw, (0, 2, 3, 4, 1)).astype(jnp.float32)

    def enc(h, name):
        return norm_act(conv3d_3x3x3(h, params[name]))

    # encoder
    e0 = enc(x, "ec0")
    syn0 = enc(e0, "ec1")
    e1 = maxpool3d_2(syn0)
    e2 = enc(e1, "ec2")
    syn1 = enc(e2, "ec3")
    e3 = maxpool3d_2(syn1)
    e4 = enc(e3, "ec4")
    syn2 = enc(e4, "ec5")
    e5 = maxpool3d_2(syn2)
    e6 = enc(e5, "ec6")
    syn3 = enc(e6, "ec7")
    e7 = maxpool3d_2(syn3)
    e8 = enc(e7, "ec8")
    e9 = enc(e8, "ec9")
    el = conv3d_1x1x1(e9, params["el_w"], params["el_b"])

    # decoder (concat along channels = last axis in channels-last layout)
    d12 = jnp.concatenate(
        [norm_act(convT3d_2x2x2_s2(el, params["dc12"])), syn3], axis=-1)
    d11 = norm_act(convT3d_3x3x3(d12, params["dc11"]))
    d10 = norm_act(convT3d_3x3x3(d11, params["dc10"]))
    d9 = jnp.concatenate(
        [norm_act(convT3d_2x2x2_s2(d10, params["dc9"])), syn2], axis=-1)
    d8 = norm_act(convT3d_3x3x3(d9, params["dc8"]))
    d7 = norm_act(convT3d_3x3x3(d8, params["dc7"]))
    d6 = jnp.concatenate(
        [norm_act(convT3d_2x2x2_s2(d7, params["dc6"])), syn1], axis=-1)
    d5 = norm_act(convT3d_3x3x3(d6, params["dc5"]))
    d4 = norm_act(convT3d_3x3x3(d5, params["dc4"]))
    d3 = jnp.concatenate(
        [norm_act(convT3d_2x2x2_s2(d4, params["dc3"])), syn0], axis=-1)
    d2 = norm_act(convT3d_3x3x3(d3, params["dc2"]))
    d1 = norm_act(convT3d_3x3x3(d2, params["dc1"]))
    d0 = norm_act(convT3d_1x1x1(d1, params["dc0"]))
    out = convT3d_1x1x1(d0, params["dl_w"], params["dl_b"])

    return jnp.transpose(out, (0, 4, 1, 2, 3))   # back to NCDHW


if __name__ == "__main__":
    # Spatial dims must be divisible by 16 (4 levels of MaxPool3d(2)); 32x16x16
    # keeps >1 spatial element at the deepest level while staying small.
    n_in, n_out = 1, 3
    N, D, H, W = 1, 32, 16, 16

    params = make_params(n_in, n_out)
    x = jax.random.normal(jax.random.PRNGKey(0), (N, n_in, D, H, W),
                          dtype=jnp.float32)

    out = deep_synbo_unet3d_forward(params, x)
    out = jax.block_until_ready(out)
    assert out.shape == (N, n_out, D, H, W), out.shape
    assert bool(jnp.all(jnp.isfinite(out)))
    print("KERNEL_OK")
</pallas_src>

<mosaic_0001>
module attributes {stable_mosaic.version = 11 : i64} {
  func.func @_mm_kernel(%arg0: i32, %arg1: i32, %arg2: i32, %arg3: memref<512x27xf32, #tpu.memory_space<vmem>>, %arg4: memref<27x32xbf16, #tpu.memory_space<vmem>>, %arg5: memref<1x32xf32, #tpu.memory_space<vmem>>, %arg6: memref<512x32xf32, #tpu.memory_space<vmem>>, %arg7: memref<512x32xf32, #tpu.memory_space<vmem>>) attributes {dimension_semantics = [#tpu.dimension_semantics<parallel>, #tpu.dimension_semantics<parallel>, #tpu.dimension_semantics<arbitrary>], iteration_bounds = array<i64: 16, 1, 1>, scalar_prefetch = 0 : i64, scratch_operands = 1 : i64, tpu.core_type = #tpu.core_type<tc>, window_params = [{transform_indices = @transform_0, window_bounds = array<i64: 512, 27>}, {transform_indices = @transform_1, window_bounds = array<i64: 27, 32>}, {transform_indices = @transform_2, window_bounds = array<i64: 1, 32>}, {transform_indices = @transform_3, window_bounds = array<i64: 512, 32>}]} {
    %c0_i32 = arith.constant 0 : i32
    %0 = arith.cmpi eq, %arg2, %c0_i32 : i32
    %1 = arith.extui %0 : i1 to i32
    %c0_i32_0 = arith.constant 0 : i32
    %2 = arith.cmpi ne, %1, %c0_i32_0 : i32
    scf.if %2 {
      %cst_10 = arith.constant 0.000000e+00 : f32
      %13 = vector.broadcast %cst_10 : f32 to vector<512x32xf32>
      %c0_11 = arith.constant 0 : index
      %c0_12 = arith.constant 0 : index
      %14 = vector.load %arg7[%c0_11, %c0_12] : memref<512x32xf32, #tpu.memory_space<vmem>>, vector<512x32xf32>
      tpu.vector_store %arg7[%c0_11, %c0_12], %13 {strides = array<i32>} : memref<512x32xf32, #tpu.memory_space<vmem>>, vector<512x32xf32>,
    } else {
    }
    %c0 = arith.constant 0 : index
    %c0_1 = arith.constant 0 : index
    %3 = vector.load %arg7[%c0, %c0_1] : memref<512x32xf32, #tpu.memory_space<vmem>>, vector<512x32xf32>
    %c0_2 = arith.constant 0 : index
    %c0_3 = arith.constant 0 : index
    %4 = vector.load %arg3[%c0_2, %c0_3] : memref<512x27xf32, #tpu.memory_space<vmem>>, vector<512x27xf32>
    %5 = arith.truncf %4 : vector<512x27xf32> to vector<512x27xbf16>
    %c0_4 = arith.constant 0 : index
    %c0_5 = arith.constant 0 : index
    %6 = vector.load %arg4[%c0_4, %c0_5] : memref<27x32xbf16, #tpu.memory_space<vmem>>, vector<27x32xbf16>
    %cst = arith.constant dense<0.000000e+00> : vector<512x32xf32>
    %7 = tpu.matmul %5, %6, %cst {dimension_numbers = #tpu.dot_dimension_numbers<[1], [0], [0], [1], [0, 0, 1, 1], [], []>} : vector<512x27xbf16>, vector<27x32xbf16>, vector<512x32xf32> -> vector<512x32xf32>
    %8 = arith.addf %3, %7 : vector<512x32xf32>
    %c0_6 = arith.constant 0 : index
    %c0_7 = arith.constant 0 : index
    %9 = vector.load %arg7[%c0_6, %c0_7] : memref<512x32xf32, #tpu.memory_space<vmem>>, vector<512x32xf32>
    tpu.vector_store %arg7[%c0_6, %c0_7], %8 {strides = array<i32>} : memref<512x32xf32, #tpu.memory_space<vmem>>, vector<512x32xf32>,
    %c0_i32_8 = arith.constant 0 : i32
    %10 = arith.cmpi eq, %arg2, %c0_i32_8 : i32
    %11 = arith.extui %10 : i1 to i32
    %c0_i32_9 = arith.constant 0 : i32
    %12 = arith.cmpi ne, %11, %c0_i32_9 : i32
    scf.if %12 {
      %c0_10 = arith.constant 0 : index
      %c0_11 = arith.constant 0 : index
      %13 = vector.load %arg7[%c0_10, %c0_11] : memref<512x32xf32, #tpu.memory_space<vmem>>, vector<512x32xf32>
      %c0_12 = arith.constant 0 : index
      %c0_13 = arith.constant 0 : index
      %14 = vector.load %arg5[%c0_12, %c0_13] : memref<1x32xf32, #tpu.memory_space<vmem>>, vector<1x32xf32>
      %15 = vector.broadcast %14 : vector<1x32xf32> to vector<512x32xf32>
      %16 = arith.addf %13, %15 : vector<512x32xf32>
      %c0_14 = arith.constant 0 : index
      %c0_15 = arith.constant 0 : index
      %17 = vector.load %arg6[%c0_14, %c0_15] : memref<512x32xf32, #tpu.memory_space<vmem>>, vector<512x32xf32>
      tpu.vector_store %arg6[%c0_14, %c0_15], %16 {strides = array<i32>} : memref<512x32xf32, #tpu.memory_space<vmem>>, vector<512x32xf32>,
    } else {
    }
    return
  }
  func.func @transform_0(%arg0: i32, %arg1: i32, %arg2: i32) -> (i32, i32) {
    %c0_i32 = arith.constant 0 : i32
    return %arg0, %arg2 : i32, i32
  }
  func.func @transform_1(%arg0: i32, %arg1: i32, %arg2: i32) -> (i32, i32) {
    %c0_i32 = arith.constant 0 : i32
    return %arg2, %arg1 : i32, i32
  }
  func.func @transform_2(%arg0: i32, %arg1: i32, %arg2: i32) -> (i32, i32) {
    %c0_i32 = arith.constant 0 : i32
    %c0_i32_0 = arith.constant 0 : i32
    return %c0_i32, %arg1 : i32, i32
  }
  func.func @transform_3(%arg0: i32, %arg1: i32, %arg2: i32) -> (i32, i32) {
    %c0_i32 = arith.constant 0 : i32
    return %arg0, %arg1 : i32, i32
  }
}

</mosaic_0001>

<llo_original>
// kernel: tpu_custom_call.1
$region0: #{tpu_custom_call.1}
  #allocation0 [shape = 'u32[]', space=smem, size = 0x4, offset = 0x4, fixed_abs, tag = 'smem constant byte address 0x4 - core index']
  #allocation1 [shape = 'u32[144,128]{1,0:T(1,128)}', space=vmem, size = 0x12000, scoped, tag = 'internal scratch']
  #allocation2 [shape = 'f32[512,32]{1,0:T(8,128)}', space=vmem, size = 0x40000, scoped, tag = 'scratch operand']
  %s0 = inlined_call_operand.vmem [shape: f32[8192,27], index: 0, kind: input, shape index: {}]
  %s1 = inlined_call_operand.vmem [shape: bf16[27,32], index: 1, kind: input, shape index: {}]
  %s2 = inlined_call_operand.vmem [shape: f32[1,32], index: 2, kind: input, shape index: {}]
  %s3 = inlined_call_operand.vmem [shape: f32[8192,32], index: 3, kind: output, shape index: {}]
  %s4 = sld [smem:[#allocation0]]
  $region53: #{tpu_custom_call.1} parent=0
    _
  %s6 = ssub.s32 1, %s4
  %s7 = scalar_select 0, %s6, %s4
  loop: start=0, step=1, limit=18
  $region2: #{tpu_custom_call.1} parent=0 // loop_pre_header
    _
  $region3: #{tpu_custom_call.1} parent=0 // loop_header
    %s9 = sphi 0, %s13
    %p10 = scmp.ge.s32.totalorder %s9, 18
    %s16 = sphi 0, %s35
    %s17 = sphi 0, %s31
    %s18 = sphi 0, %s27
    %s19 = sphi 0, %s16
    %s20 = sphi 0, %s17
    %s21 = sphi 0, %s18
    %s22 = sphi 0, %s19
    %s23 = sphi 0, %s20
    %s24 = sphi 0, %s21
    %s40 = sphi 0, %s42
    %s43 = sphi 0, %s40
    %s44 = sphi 0, %s43
    %s60 = sphi 0, %s44
    %s68 = sphi 0, %s70
    %s71 = sphi 0, %s68
    %s72 = sphi 0, %s71
    %s88 = sphi 0, %s72
    %s94 = sphi 0, %s96
    %s97 = sphi 0, %s94
    %s98 = sphi 0, %s97
    %s114 = sphi 0, %s98
    %s122 = sphi 0, %s124
    %s125 = sphi 0, %s122
    %s126 = sphi 0, %s125
    %s142 = sphi 0, %s126
  $region4: #{tpu_custom_call.1} parent=0 // loop_header_branch
    %12 = sbr.rel (%p10) target = $region8
  $region5: #{tpu_custom_call.1} parent=0 // loop_body
    %s14 = ssub.s32 %s9, 1
    %s15 = ssub.s32 %s9, 2
    %s25 = sadd.s32 1, %s18
    %p26 = scmp.ge.s32.totalorder %s25, 1
    %s27 = scalar_select %p26, 0, %s25
    %s28 = sadd.s32 1, %s17
    %s29 = scalar_select %p26, %s28, %s17
    %p30 = scmp.ge.s32.totalorder %s29, 1
    %s31 = scalar_select %p30, 0, %s29
    %s32 = sadd.s32 1, %s16
    %s33 = scalar_select %p30, %s32, %s16
    %p34 = scmp.ge.s32.totalorder %s33, 16
    %s35 = scalar_select %p34, 0, %s33
    %s36 = ssub.s32 %s16, %s35
    %s37 = ssub.s32 %s18, %s27
    %s38 = sor.u32 %s36, %s37
    %p39 = scmp.eq.s32.totalorder %s38, 0
    %s41 = sadd.s32 %s40, 1
    %s42 = scalar_select %p39, %s40, %s41
    %p45 = pneg %p39
    %p46 = scmp.eq.s32.totalorder %s9, 15
    %p47 = por %p45, %p46
    %p48 = scmp.ne.s32.totalorder %s40, %s43
    %p49 = scmp.eq.s32.totalorder %s9, 0
    %p50 = por %p48, %p49
    %p51 = scmp.ne.s32.totalorder %s40, %s43
    %p52 = scmp.eq.s32.totalorder %s14, 15
    %p53 = por %p51, %p52
    %p54 = scmp.ne.s32.totalorder %s43, %s44
    %p55 = scmp.eq.s32.totalorder %s14, 0
    %p56 = por %p54, %p55
    %p57 = scmp.ne.s32.totalorder %s43, %s44
    %p58 = scmp.eq.s32.totalorder %s15, 15
    %p59 = por %p57, %p58
    %p61 = scmp.ne.s32.totalorder %s44, %s60
    %p62 = scmp.eq.s32.totalorder %s15, 0
    %p63 = por %p61, %p62
    %s64 = ssub.s32 %s18, %s27
    %s65 = ssub.s32 %s17, %s31
    %s66 = sor.u32 %s64, %s65
    %p67 = scmp.eq.s32.totalorder %s66, 0
    %s69 = sadd.s32 %s68, 1
    %s70 = scalar_select %p67, %s68, %s69
    %p73 = pneg %p67
    %p74 = scmp.eq.s32.totalorder %s9, 15
    %p75 = por %p73, %p74
    %p76 = scmp.ne.s32.totalorder %s68, %s71
    %p77 = scmp.eq.s32.totalorder %s9, 0
    %p78 = por %p76, %p77
    %p79 = scmp.ne.s32.totalorder %s68, %s71
    %p80 = scmp.eq.s32.totalorder %s14, 15
    %p81 = por %p79, %p80
    %p82 = scmp.ne.s32.totalorder %s71, %s72
    %p83 = scmp.eq.s32.totalorder %s14, 0
    %p84 = por %p82, %p83
    %p85 = scmp.ne.s32.totalorder %s71, %s72
    %p86 = scmp.eq.s32.totalorder %s15, 15
    %p87 = por %p85, %p86
    %p89 = scmp.ne.s32.totalorder %s72, %s88
    %p90 = scmp.eq.s32.totalorder %s15, 0
    %p91 = por %p89, %p90
    %s92 = ssub.s32 %s17, %s31
    %p93 = scmp.eq.s32.totalorder %s92, 0
    %s95 = sadd.s32 %s94, 1
    %s96 = scalar_select %p93, %s94, %s95
    %p99 = pneg %p93
    %p100 = scmp.eq.s32.totalorder %s9, 15
    %p101 = por %p99, %p100
    %p102 = scmp.ne.s32.totalorder %s94, %s97
    %p103 = scmp.eq.s32.totalorder %s9, 0
    %p104 = por %p102, %p103
    %p105 = scmp.ne.s32.totalorder %s94, %s97
    %p106 = scmp.eq.s32.totalorder %s14, 15
    %p107 = por %p105, %p106
    %p108 = scmp.ne.s32.totalorder %s97, %s98
    %p109 = scmp.eq.s32.totalorder %s14, 0
    %p110 = por %p108, %p109
    %p111 = scmp.ne.s32.totalorder %s97, %s98
    %p112 = scmp.eq.s32.totalorder %s15, 15
    %p113 = por %p111, %p112
    %p115 = scmp.ne.s32.totalorder %s98, %s114
    %p116 = scmp.eq.s32.totalorder %s15, 0
    %p117 = por %p115, %p116
    %s118 = ssub.s32 %s16, %s35
    %s119 = ssub.s32 %s17, %s31
    %s120 = sor.u32 %s118, %s119
    %p121 = scmp.eq.s32.totalorder %s120, 0
    %s123 = sadd.s32 %s122, 1
    %s124 = scalar_select %p121, %s122, %s123
    %p127 = pneg %p121
    %p128 = scmp.eq.s32.totalorder %s9, 15
    %p129 = por %p127, %p128
    %p130 = scmp.ne.s32.totalorder %s122, %s125
    %p131 = scmp.eq.s32.totalorder %s9, 0
    %p132 = por %p130, %p131
    %p133 = scmp.ne.s32.totalorder %s122, %s125
    %p134 = scmp.eq.s32.totalorder %s14, 15
    %p135 = por %p133, %p134
    %p136 = scmp.ne.s32.totalorder %s125, %s126
    %p137 = scmp.eq.s32.totalorder %s14, 0
    %p138 = por %p136, %p137
    %p139 = scmp.ne.s32.totalorder %s125, %s126
    %p140 = scmp.eq.s32.totalorder %s15, 15
    %p141 = por %p139, %p140
    %p143 = scmp.ne.s32.totalorder %s126, %s142
    %p144 = scmp.eq.s32.totalorder %s15, 0
    %p145 = por %p143, %p144
    %p146 = scmp.le.s32.totalorder 1, %s9
    %p147 = scmp.lt.s32.totalorder %s9, 17
    %p148 = pnand %p146, %p147
    %p149 = pneg %p148
    // Predicated region
    $region9: #{tpu_custom_call.1} parent=5 // pred_check
      _
    $region10: #{tpu_custom_call.1} parent=5 // pred_check_branch
      %151 = sbr.rel (%p148) target = $region12
    $region11: #{tpu_custom_call.1} parent=5 // pred_region
      %s152 = ssub.s32 %s9, 1
      // Predicated region
      $region13: #{tpu_custom_call.1} parent=11 // pred_check
        %p153 = pneg %p84
      $region14: #{tpu_custom_call.1} parent=11 // pred_check_branch
        %155 = sbr.rel (%p153) target = $region16
      $region15: #{tpu_custom_call.1} parent=11 // pred_region
        %s156 = smul.u32 4, %s21
        %p157 = scmp.lt.s32.totalorder %s156, 3
        %s158 = scalar_select %p157, %s156, 3
        %p159 = scmp.lt.s32.totalorder %s20, 0
        %s160 = scalar_select %p159, %s20, 0
        %s161 = sadd.s32 %s160, %s158
        %s162 = smul.addr %s161, 4
        %s163 = scalar_lea.vmem %s1, %s162
        %s164 = smul.u32 4, %s21
      $region16: #{tpu_custom_call.1} parent=11 // pred_fallthru
        _
      // Predicated region
      $region17: #{tpu_custom_call.1} parent=11 // pred_check
        %p165 = pneg %p110
      $region18: #{tpu_custom_call.1} parent=11 // pred_check_branch
        %167 = sbr.rel (%p165) target = $region20
      $region19: #{tpu_custom_call.1} parent=11 // pred_region
        %p168 = scmp.lt.s32.totalorder %s20, 0
        %s169 = scalar_select %p168, %s20, 0
        %s170 = scalar_lea.vmem %s2, %s169
      $region20: #{tpu_custom_call.1} parent=11 // pred_fallthru
        _
    $region12: #{tpu_custom_call.1} parent=5 // pred_fallthru
      _
    %p171 = scmp.lt.s32.totalorder %s9, 16
    // Predicated region
    $region21: #{tpu_custom_call.1} parent=5 // pred_check
      %p172 = pneg %p171
    $region22: #{tpu_custom_call.1} parent=5 // pred_check_branch
      %174 = sbr.rel (%p172) target = $region24
    $region23: #{tpu_custom_call.1} parent=5 // pred_region
      // Predicated region
      $region25: #{tpu_custom_call.1} parent=23 // pred_check
        %p175 = pneg %p50
      $region26: #{tpu_custom_call.1} parent=23 // pred_check_branch
        %177 = sbr.rel (%p175) target = $region28
      $region27: #{tpu_custom_call.1} parent=23 // pred_region
        %s178 = smul.u32 64, %s16
        %p179 = scmp.lt.s32.totalorder %s178, 1023
        %s180 = scalar_select %p179, %s178, 1023
        %p181 = scmp.lt.s32.totalorder %s18, 0
        %s182 = scalar_select %p181, %s18, 0
        %s183 = sadd.s32 %s182, %s180
        %s184 = smul.addr %s183, 8
        %s185 = scalar_lea.vmem %s0, %s184
        %s186 = smul.u32 64, %s16
      $region28: #{tpu_custom_call.1} parent=23 // pred_fallthru
        _
    $region24: #{tpu_custom_call.1} parent=5 // pred_fallthru
      _
    %p187 = scmp.le.s32.totalorder 1, %s9
    %p188 = scmp.lt.s32.totalorder %s9, 17
    %p189 = pnand %p187, %p188
    %p190 = pneg %p189
    // Predicated region
    $region29: #{tpu_custom_call.1} parent=5 // pred_check
      _
    $region30: #{tpu_custom_call.1} parent=5 // pred_check_branch
      %192 = sbr.rel (%p189) target = $region32
    $region31: #{tpu_custom_call.1} parent=5 // pred_region
      %s193 = ssub.s32 %s9, 1
      %s194 = smul.u32 64, %s19
      %p195 = scmp.lt.s32.totalorder %s194, 1023
      %s196 = scalar_select %p195, %s194, 1023
      %p197 = scmp.lt.s32.totalorder %s21, 0
      %s198 = scalar_select %p197, %s21, 0
      %s199 = sadd.s32 %s198, %s196
      %s200 = smul.addr %s199, 8
      %s201 = scalar_lea.vmem %s0, %s200
      %p202 = pneg %p56
      %p203 = pneg %p53
      %s204 = smul.u32 4, %s21
      %p205 = scmp.lt.s32.totalorder %s204, 3
      %s206 = scalar_select %p205, %s204, 3
      %p207 = scmp.lt.s32.totalorder %s20, 0
      %s208 = scalar_select %p207, %s20, 0
      %s209 = sadd.s32 %s208, %s206
      %s210 = smul.addr %s209, 4
      %s211 = scalar_lea.vmem %s1, %s210
      %p212 = pneg %p84
      %p213 = pneg %p81
      %p214 = scmp.lt.s32.totalorder %s20, 0
      %s215 = scalar_select %p214, %s20, 0
      %s216 = scalar_lea.vmem %s2, %s215
      %p217 = pneg %p110
      %p218 = pneg %p107
      %p219 = pneg %p138
      %p220 = pneg %p135
      %s221 = smul.u32 64, %s19
      %p222 = scmp.lt.s32.totalorder %s221, 1023
      %s223 = scalar_select %p222, %s221, 1023
      %p224 = scmp.lt.s32.totalorder %s20, 0
      %s225 = scalar_select %p224, %s20, 0
      %s226 = sadd.s32 %s225, %s223
      %s227 = smul.addr %s226, 8
      %s228 = scalar_lea.vmem %s3, %s227
      %s229 = smul.u32 64, %s19
      %p230 = scmp.lt.s32.totalorder %s229, 1023
      %s231 = scalar_select %p230, %s229, 1023
      %p232 = scmp.lt.s32.totalorder %s21, 0
      %s233 = scalar_select %p232, %s21, 0
      %s234 = sadd.s32 %s233, %s231
      %s235 = smul.addr %s234, 8
      %s236 = scalar_lea.vmem %s0, %s235
      %s237 = smul.u32 64, %s19
      %s238 = smul.u32 4, %s21
      %p239 = scmp.lt.s32.totalorder %s238, 3
      %s240 = scalar_select %p239, %s238, 3
      %p241 = scmp.lt.s32.totalorder %s20, 0
      %s242 = scalar_select %p241, %s20, 0
      %s243 = sadd.s32 %s242, %s240
      %s244 = smul.addr %s243, 4
      %s245 = scalar_lea.vmem %s1, %s244
      %s246 = smul.u32 4, %s21
      %p247 = scmp.lt.s32.totalorder %s20, 0
      %s248 = scalar_select %p247, %s20, 0
      %s249 = scalar_lea.vmem %s2, %s248
      %s250 = smul.u32 64, %s19
      %p251 = scmp.lt.s32.totalorder %s250, 1023
      %s252 = scalar_select %p251, %s250, 1023
      %p253 = scmp.lt.s32.totalorder %s20, 0
      %s254 = scalar_select %p253, %s20, 0
      %s255 = sadd.s32 %s254, %s252
      %s256 = smul.addr %s255, 8
      %s257 = scalar_lea.vmem %s3, %s256
      %s258 = smul.u32 64, %s19
      %p260 = scmp.eq.s32.totalorder %s21, 0
      // Predicated region
      $region33: #{tpu_custom_call.1} parent=31 // pred_check
        %p261 = pneg %p260
      $region34: #{tpu_custom_call.1} parent=31 // pred_check_branch
        %263 = sbr.rel (%p261) target = $region36
      $region35: #{tpu_custom_call.1} parent=31 // pred_region
        %vm264 = vcmask 261120
        %265 = vst.msk [vmem:[#allocation2] sm:$0xff] %vm264, 0.0
        %266 = vst.msk [vmem:[#allocation2 + $0x8] sm:$0xff] %vm264, 0.0
        %267 = vst.msk [vmem:[#allocation2 + $0x10] sm:$0xff] %vm264, 0.0
        %268 = vst.msk [vmem:[#allocation2 + $0x18] sm:$0xff] %vm264, 0.0
        %269 = vst.msk [vmem:[#allocation2 + $0x20] sm:$0xff] %vm264, 0.0
        %270 = vst.msk [vmem:[#allocation2 + $0x28] sm:$0xff] %vm264, 0.0
        %271 = vst.msk [vmem:[#allocation2 + $0x30] sm:$0xff] %vm264, 0.0
        %272 = vst.msk [vmem:[#allocation2 + $0x38] sm:$0xff] %vm264, 0.0
        %273 = vst.msk [vmem:[#allocation2 + $0x40] sm:$0xff] %vm264, 0.0
        %274 = vst.msk [vmem:[#allocation2 + $0x48] sm:$0xff] %vm264, 0.0
        %275 = vst.msk [vmem:[#allocation2 + $0x50] sm:$0xff] %vm264, 0.0
        %276 = vst.msk [vmem:[#allocation2 + $0x58] sm:$0xff] %vm264, 0.0
        %277 = vst.msk [vmem:[#allocation2 + $0x60] sm:$0xff] %vm264, 0.0
        %278 = vst.msk [vmem:[#allocation2 + $0x68] sm:$0xff] %vm264, 0.0
        %279 = vst.msk [vmem:[#allocation2 + $0x70] sm:$0xff] %vm264, 0.0
        %280 = vst.msk [vmem:[#allocation2 + $0x78] sm:$0xff] %vm264, 0.0
        %281 = vst.msk [vmem:[#allocation2 + $0x80] sm:$0xff] %vm264, 0.0
        %282 = vst.msk [vmem:[#allocation2 + $0x88] sm:$0xff] %vm264, 0.0
        %283 = vst.msk [vmem:[#allocation2 + $0x90] sm:$0xff] %vm264, 0.0
        %284 = vst.msk [vmem:[#allocation2 + $0x98] sm:$0xff] %vm264, 0.0
        %285 = vst.msk [vmem:[#allocation2 + $0xa0] sm:$0xff] %vm264, 0.0
        %286 = vst.msk [vmem:[#allocation2 + $0xa8] sm:$0xff] %vm264, 0.0
        %287 = vst.msk [vmem:[#allocation2 + $0xb0] sm:$0xff] %vm264, 0.0
        %288 = vst.msk [vmem:[#allocation2 + $0xb8] sm:$0xff] %vm264, 0.0
        %289 = vst.msk [vmem:[#allocation2 + $0xc0] sm:$0xff] %vm264, 0.0
        %290 = vst.msk [vmem:[#allocation2 + $0xc8] sm:$0xff] %vm264, 0.0
        %291 = vst.msk [vmem:[#allocation2 + $0xd0] sm:$0xff] %vm264, 0.0
        %292 = vst.msk [vmem:[#allocation2 + $0xd8] sm:$0xff] %vm264, 0.0
        %293 = vst.msk [vmem:[#allocation2 + $0xe0] sm:$0xff] %vm264, 0.0
        %294 = vst.msk [vmem:[#allocation2 + $0xe8] sm:$0xff] %vm264, 0.0
        %295 = vst.msk [vmem:[#allocation2 + $0xf0] sm:$0xff] %vm264, 0.0
        %296 = vst.msk [vmem:[#allocation2 + $0xf8] sm:$0xff] %vm264, 0.0
        %297 = vst.msk [vmem:[#allocation2 + $0x100] sm:$0xff] %vm264, 0.0
        %298 = vst.msk [vmem:[#allocation2 + $0x108] sm:$0xff] %vm264, 0.0
        %299 = vst.msk [vmem:[#allocation2 + $0x110] sm:$0xff] %vm264, 0.0
        %300 = vst.msk [vmem:[#allocation2 + $0x118] sm:$0xff] %vm264, 0.0
        %301 = vst.msk [vmem:[#allocation2 + $0x120] sm:$0xff] %vm264, 0.0
        %302 = vst.msk [vmem:[#allocation2 + $0x128] sm:$0xff] %vm264, 0.0
        %303 = vst.msk [vmem:[#allocation2 + $0x130] sm:$0xff] %vm264, 0.0
        %304 = vst.msk [vmem:[#allocation2 + $0x138] sm:$0xff] %vm264, 0.0
        %305 = vst.msk [vmem:[#allocation2 + $0x140] sm:$0xff] %vm264, 0.0
        %306 = vst.msk [vmem:[#allocation2 + $0x148] sm:$0xff] %vm264, 0.0
        %307 = vst.msk [vmem:[#allocation2 + $0x150] sm:$0xff] %vm264, 0.0
        %308 = vst.msk [vmem:[#allocation2 + $0x158] sm:$0xff] %vm264, 0.0
        %309 = vst.msk [vmem:[#allocation2 + $0x160] sm:$0xff] %vm264, 0.0
        %310 = vst.msk [vmem:[#allocation2 + $0x168] sm:$0xff] %vm264, 0.0
        %311 = vst.msk [vmem:[#allocation2 + $0x170] sm:$0xff] %vm264, 0.0
        %312 = vst.msk [vmem:[#allocation2 + $0x178] sm:$0xff] %vm264, 0.0
        %313 = vst.msk [vmem:[#allocation2 + $0x180] sm:$0xff] %vm264, 0.0
        %314 = vst.msk [vmem:[#allocation2 + $0x188] sm:$0xff] %vm264, 0.0
        %315 = vst.msk [vmem:[#allocation2 + $0x190] sm:$0xff] %vm264, 0.0
        %316 = vst.msk [vmem:[#allocation2 + $0x198] sm:$0xff] %vm264, 0.0
        %317 = vst.msk [vmem:[#allocation2 + $0x1a0] sm:$0xff] %vm264, 0.0
        %318 = vst.msk [vmem:[#allocation2 + $0x1a8] sm:$0xff] %vm264, 0.0
        %319 = vst.msk [vmem:[#allocation2 + $0x1b0] sm:$0xff] %vm264, 0.0
        %320 = vst.msk [vmem:[#allocation2 + $0x1b8] sm:$0xff] %vm264, 0.0
        %321 = vst.msk [vmem:[#allocation2 + $0x1c0] sm:$0xff] %vm264, 0.0
        %322 = vst.msk [vmem:[#allocation2 + $0x1c8] sm:$0xff] %vm264, 0.0
        %323 = vst.msk [vmem:[#allocation2 + $0x1d0] sm:$0xff] %vm264, 0.0
        %324 = vst.msk [vmem:[#allocation2 + $0x1d8] sm:$0xff] %vm264, 0.0
        %325 = vst.msk [vmem:[#allocation2 + $0x1e0] sm:$0xff] %vm264, 0.0
        %326 = vst.msk [vmem:[#allocation2 + $0x1e8] sm:$0xff] %vm264, 0.0
        %327 = vst.msk [vmem:[#allocation2 + $0x1f0] sm:$0xff] %vm264, 0.0
        %328 = vst.msk [vmem:[#allocation2 + $0x1f8] sm:$0xff] %vm264, 0.0
      $region36: #{tpu_custom_call.1} parent=31 // pred_fallthru
        _
      %v329 = vld [vmem:[#allocation2] sm:$0xff]
      %v330 = vld [vmem:[#allocation2 + $0x8] sm:$0xff]
      %v331 = vld [vmem:[#allocation2 + $0x10] sm:$0xff]
      %v332 = vld [vmem:[#allocation2 + $0x18] sm:$0xff]
      %v333 = vld [vmem:[#allocation2 + $0x20] sm:$0xff]
      %v334 = vld [vmem:[#allocation2 + $0x28] sm:$0xff]
      %v335 = vld [vmem:[#allocation2 + $0x30] sm:$0xff]
      %v336 = vld [vmem:[#allocation2 + $0x38] sm:$0xff]
      %v337 = vld [vmem:[#allocation2 + $0x40] sm:$0xff]
      %v338 = vld [vmem:[#allocation2 + $0x48] sm:$0xff]
      %v339 = vld [vmem:[#allocation2 + $0x50] sm:$0xff]
      %v340 = vld [vmem:[#allocation2 + $0x58] sm:$0xff]
      %v341 = vld [vmem:[#allocation2 + $0x60] sm:$0xff]
      %v342 = vld [vmem:[#allocation2 + $0x68] sm:$0xff]
      %v343 = vld [vmem:[#allocation2 + $0x70] sm:$0xff]
      %v344 = vld [vmem:[#allocation2 + $0x78] sm:$0xff]
      %v345 = vld [vmem:[#allocation2 + $0x80] sm:$0xff]
      %v346 = vld [vmem:[#allocation2 + $0x88] sm:$0xff]
      %v347 = vld [vmem:[#allocation2 + $0x90] sm:$0xff]
      %v348 = vld [vmem:[#allocation2 + $0x98] sm:$0xff]
      %v349 = vld [vmem:[#allocation2 + $0xa0] sm:$0xff]
      %v350 = vld [vmem:[#allocation2 + $0xa8] sm:$0xff]
      %v351 = vld [vmem:[#allocation2 + $0xb0] sm:$0xff]
      %v352 = vld [vmem:[#allocation2 + $0xb8] sm:$0xff]
      %v353 = vld [vmem:[#allocation2 + $0xc0] sm:$0xff]
      %v354 = vld [vmem:[#allocation2 + $0xc8] sm:$0xff]
      %v355 = vld [vmem:[#allocation2 + $0xd0] sm:$0xff]
      %v356 = vld [vmem:[#allocation2 + $0xd8] sm:$0xff]
      %v357 = vld [vmem:[#allocation2 + $0xe0] sm:$0xff]
      %v358 = vld [vmem:[#allocation2 + $0xe8] sm:$0xff]
      %v359 = vld [vmem:[#allocation2 + $0xf0] sm:$0xff]
      %v360 = vld [vmem:[#allocation2 + $0xf8] sm:$0xff]
      %v361 = vld [vmem:[#allocation2 + $0x100] sm:$0xff]
      %v362 = vld [vmem:[#allocation2 + $0x108] sm:$0xff]
      %v363 = vld [vmem:[#allocation2 + $0x110] sm:$0xff]
      %v364 = vld [vmem:[#allocation2 + $0x118] sm:$0xff]
      %v365 = vld [vmem:[#allocation2 + $0x120] sm:$0xff]
      %v366 = vld [vmem:[#allocation2 + $0x128] sm:$0xff]
      %v367 = vld [vmem:[#allocation2 + $0x130] sm:$0xff]
      %v368 = vld [vmem:[#allocation2 + $0x138] sm:$0xff]
      %v369 = vld [vmem:[#allocation2 + $0x140] sm:$0xff]
      %v370 = vld [vmem:[#allocation2 + $0x148] sm:$0xff]
      %v371 = vld [vmem:[#allocation2 + $0x150] sm:$0xff]
      %v372 = vld [vmem:[#allocation2 + $0x158] sm:$0xff]
      %v373 = vld [vmem:[#allocation2 + $0x160] sm:$0xff]
      %v374 = vld [vmem:[#allocation2 + $0x168] sm:$0xff]
      %v375 = vld [vmem:[#allocation2 + $0x170] sm:$0xff]
      %v376 = vld [vmem:[#allocation2 + $0x178] sm:$0xff]
      %v377 = vld [vmem:[#allocation2 + $0x180] sm:$0xff]
      %v378 = vld [vmem:[#allocation2 + $0x188] sm:$0xff]
      %v379 = vld [vmem:[#allocation2 + $0x190] sm:$0xff]
      %v380 = vld [vmem:[#allocation2 + $0x198] sm:$0xff]
      %v381 = vld [vmem:[#allocation2 + $0x1a0] sm:$0xff]
      %v382 = vld [vmem:[#allocation2 + $0x1a8] sm:$0xff]
      %v383 = vld [vmem:[#allocation2 + $0x1b0] sm:$0xff]
      %v384 = vld [vmem:[#allocation2 + $0x1b8] sm:$0xff]
      %v385 = vld [vmem:[#allocation2 + $0x1c0] sm:$0xff]
      %v386 = vld [vmem:[#allocation2 + $0x1c8] sm:$0xff]
      %v387 = vld [vmem:[#allocation2 + $0x1d0] sm:$0xff]
      %v388 = vld [vmem:[#allocation2 + $0x1d8] sm:$0xff]
      %v389 = vld [vmem:[#allocation2 + $0x1e0] sm:$0xff]
      %v390 = vld [vmem:[#allocation2 + $0x1e8] sm:$0xff]
      %v391 = vld [vmem:[#allocation2 + $0x1f0] sm:$0xff]
      %v392 = vld [vmem:[#allocation2 + $0x1f8] sm:$0xff]
      %v393 = vld [vmem:[%s236] sm:$0xff]
      %v394 = vld [vmem:[%s236 + $0x8] sm:$0xff]
      %v395 = vld [vmem:[%s236 + $0x10] sm:$0xff]
      %v396 = vld [vmem:[%s236 + $0x18] sm:$0xff]
      %v397 = vld [vmem:[%s236 + $0x20] sm:$0xff]
      %v398 = vld [vmem:[%s236 + $0x28] sm:$0xff]
      %v399 = vld [vmem:[%s236 + $0x30] sm:$0xff]
      %v400 = vld [vmem:[%s236 + $0x38] sm:$0xff]
      %v401 = vld [vmem:[%s236 + $0x40] sm:$0xff]
      %v402 = vld [vmem:[%s236 + $0x48] sm:$0xff]
      %v403 = vld [vmem:[%s236 + $0x50] sm:$0xff]
      %v404 = vld [vmem:[%s236 + $0x58] sm:$0xff]
      %v405 = vld [vmem:[%s236 + $0x60] sm:$0xff]
      %v406 = vld [vmem:[%s236 + $0x68] sm:$0xff]
      %v407 = vld [vmem:[%s236 + $0x70] sm:$0xff]
      %v408 = vld [vmem:[%s236 + $0x78] sm:$0xff]
      %v409 = vld [vmem:[%s236 + $0x80] sm:$0xff]
      %v410 = vld [vmem:[%s236 + $0x88] sm:$0xff]
      %v411 = vld [vmem:[%s236 + $0x90] sm:$0xff]
      %v412 = vld [vmem:[%s236 + $0x98] sm:$0xff]
      %v413 = vld [vmem:[%s236 + $0xa0] sm:$0xff]
      %v414 = vld [vmem:[%s236 + $0xa8] sm:$0xff]
      %v415 = vld [vmem:[%s236 + $0xb0] sm:$0xff]
      %v416 = vld [vmem:[%s236 + $0xb8] sm:$0xff]
      %v417 = vld [vmem:[%s236 + $0xc0] sm:$0xff]
      %v418 = vld [vmem:[%s236 + $0xc8] sm:$0xff]
      %v419 = vld [vmem:[%s236 + $0xd0] sm:$0xff]
      %v420 = vld [vmem:[%s236 + $0xd8] sm:$0xff]
      %v421 = vld [vmem:[%s236 + $0xe0] sm:$0xff]
      %v422 = vld [vmem:[%s236 + $0xe8] sm:$0xff]
      %v423 = vld [vmem:[%s236 + $0xf0] sm:$0xff]
      %v424 = vld [vmem:[%s236 + $0xf8] sm:$0xff]
      %v425 = vld [vmem:[%s236 + $0x100] sm:$0xff]
      %v426 = vld [vmem:[%s236 + $0x108] sm:$0xff]
      %v427 = vld [vmem:[%s236 + $0x110] sm:$0xff]
      %v428 = vld [vmem:[%s236 + $0x118] sm:$0xff]
      %v429 = vld [vmem:[%s236 + $0x120] sm:$0xff]
      %v430 = vld [vmem:[%s236 + $0x128] sm:$0xff]
      %v431 = vld [vmem:[%s236 + $0x130] sm:$0xff]
      %v432 = vld [vmem:[%s236 + $0x138] sm:$0xff]
      %v433 = vld [vmem:[%s236 + $0x140] sm:$0xff]
      %v434 = vld [vmem:[%s236 + $0x148] sm:$0xff]
      %v435 = vld [vmem:[%s236 + $0x150] sm:$0xff]
      %v436 = vld [vmem:[%s236 + $0x158] sm:$0xff]
      %v437 = vld [vmem:[%s236 + $0x160] sm:$0xff]
      %v438 = vld [vmem:[%s236 + $0x168] sm:$0xff]
      %v439 = vld [vmem:[%s236 + $0x170] sm:$0xff]
      %v440 = vld [vmem:[%s236 + $0x178] sm:$0xff]
      %v441 = vld [vmem:[%s236 + $0x180] sm:$0xff]
      %v442 = vld [vmem:[%s236 + $0x188] sm:$0xff]
      %v443 = vld [vmem:[%s236 + $0x190] sm:$0xff]
      %v444 = vld [vmem:[%s236 + $0x198] sm:$0xff]
      %v445 = vld [vmem:[%s236 + $0x1a0] sm:$0xff]
      %v446 = vld [vmem:[%s236 + $0x1a8] sm:$0xff]
      %v447 = vld [vmem:[%s236 + $0x1b0] sm:$0xff]
      %v448 = vld [vmem:[%s236 + $0x1b8] sm:$0xff]
      %v449 = vld [vmem:[%s236 + $0x1c0] sm:$0xff]
      %v450 = vld [vmem:[%s236 + $0x1c8] sm:$0xff]
      %v451 = vld [vmem:[%s236 + $0x1d0] sm:$0xff]
      %v452 = vld [vmem:[%s236 + $0x1d8] sm:$0xff]
      %v453 = vld [vmem:[%s236 + $0x1e0] sm:$0xff]
      %v454 = vld [vmem:[%s236 + $0x1e8] sm:$0xff]
      %v455 = vld [vmem:[%s236 + $0x1f0] sm:$0xff]
      %v456 = vld [vmem:[%s236 + $0x1f8] sm:$0xff]
      %v457 = vpack.c.bf16 %v394, %v393
      %v458 = vpack.c.bf16 %v396, %v395
      %v459 = vpack.c.bf16 %v398, %v397
      %v460 = vpack.c.bf16 %v400, %v399
      %v461 = vpack.c.bf16 %v402, %v401
      %v462 = vpack.c.bf16 %v404, %v403
      %v463 = vpack.c.bf16 %v406, %v405
      %v464 = vpack.c.bf16 %v408, %v407
      %v465 = vpack.c.bf16 %v410, %v409
      %v466 = vpack.c.bf16 %v412, %v411
      %v467 = vpack.c.bf16 %v414, %v413
      %v468 = vpack.c.bf16 %v416, %v415
      %v469 = vpack.c.bf16 %v418, %v417
      %v470 = vpack.c.bf16 %v420, %v419
      %v471 = vpack.c.bf16 %v422, %v421
      %v472 = vpack.c.bf16 %v424, %v423
      %v473 = vpack.c.bf16 %v426, %v425
      %v474 = vpack.c.bf16 %v428, %v427
      %v475 = vpack.c.bf16 %v430, %v429
      %v476 = vpack.c.bf16 %v432, %v431
      %v477 = vpack.c.bf16 %v434, %v433
      %v478 = vpack.c.bf16 %v436, %v435
      %v479 = vpack.c.bf16 %v438, %v437
      %v480 = vpack.c.bf16 %v440, %v439
      %v481 = vpack.c.bf16 %v442, %v441
      %v482 = vpack.c.bf16 %v444, %v443
      %v483 = vpack.c.bf16 %v446, %v445
      %v484 = vpack.c.bf16 %v448, %v447
      %v485 = vpack.c.bf16 %v450, %v449
      %v486 = vpack.c.bf16 %v452, %v451
      %v487 = vpack.c.bf16 %v454, %v453
      %v488 = vpack.c.bf16 %v456, %v455
      %v489 = vld [vmem:[%s245] sm:$0xf]
      %v490 = vld [vmem:[%s245 + $0x4] sm:$0xf]
      %v491 = vld [vmem:[%s245 + $0x8] sm:$0xf]
      %v492 = vld [vmem:[%s245 + $0xc] sm:$0x3]
      %v497 = vunpack.c.l.b16 %v489
      %v498 = vunpack.c.l.b16 %v490
      %v499 = vunpack.c.l.b16 %v491
      %v500 = vunpack.c.l.b16 %v492
      %v501 = vpack.c.b16 %v498, %v497
      %v502 = vpack.c.b16 %v500, %v499
      %vm504 = vcmask 220160
      %v506 = vsel %vm504, %v457, 0
      %v509 = vsel %vm504, %v458, 0
      %v512 = vsel %vm504, %v459, 0
      %v515 = vsel %vm504, %v460, 0
      %v518 = vsel %vm504, %v461, 0
      %v521 = vsel %vm504, %v462, 0
      %v524 = vsel %vm504, %v463, 0
      %v527 = vsel %vm504, %v464, 0
      %v530 = vsel %vm504, %v465, 0
      %v533 = vsel %vm504, %v466, 0
      %v536 = vsel %vm504, %v467, 0
      %v539 = vsel %vm504, %v468, 0
      %v542 = vsel %vm504, %v469, 0
      %v545 = vsel %vm504, %v470, 0
      %v548 = vsel %vm504, %v471, 0
      %v551 = vsel %vm504, %v472, 0
      %v554 = vsel %vm504, %v473, 0
      %v557 = vsel %vm504, %v474, 0
      %v560 = vsel %vm504, %v475, 0
      %v563 = vsel %vm504, %v476, 0
      %v566 = vsel %vm504, %v477, 0
      %v569 = vsel %vm504, %v478, 0
      %v572 = vsel %vm504, %v479, 0
      %v575 = vsel %vm504, %v480, 0
      %v578 = vsel %vm504, %v481, 0
      %v581 = vsel %vm504, %v482, 0
      %v584 = vsel %vm504, %v483, 0
      %v587 = vsel %vm504, %v484, 0
      %v590 = vsel %vm504, %v485, 0
      %v593 = vsel %vm504, %v486, 0
      %v596 = vsel %vm504, %v487, 0
      %v599 = vsel %vm504, %v488, 0
      %vm601 = vcmask 1044480
      %vm602 = vcmask 1045504
      %v603 = vsel %vm601, 4294967295, 65535
      %v604 = vsel %vm602, %v603, 0
      %v606 = vand.u32 %v502, %v604
      %608 = vmatprep.subr.bf16.mxu0 0
      %609 = vmatpush1.bf16.msra.mxu0 0
      %610 = vmatprep.subr.bf16.mxu0 0
      %611 = vmatpush1.bf16.msra.mxu0 0
      %612 = vmatprep.subr.bf16.mxu0 0
      %613 = vmatpush1.bf16.msra.mxu0 0
      %614 = vmatprep.subr.bf16.mxu0 0
      %615 = vmatpush1.bf16.msra.mxu0 0
      %616 = vmatprep.subr.bf16.mxu0 0
      %617 = vmatpush1.bf16.msra.mxu0 0
      %618 = vmatprep.subr.bf16.mxu0 0
      %619 = vmatpush1.bf16.msra.mxu0 0
      %620 = vmatprep.subr.bf16.mxu0 0
      %621 = vmatpush1.bf16.msra.mxu0 %v606
      %622 = vmatprep.subr.bf16.mxu0 0
      %623 = vmatpush1.bf16.msra.mxu0 %v501
      %624 = vmatprep.subr.bf16.mxu0 0
      %625 = vmatpush2.bf16.msra.mxu0 0
      %626 = vmatprep.subr.bf16.mxu0 0
      %627 = vmatpush2.bf16.msra.mxu0 0
      %628 = vmatprep.subr.bf16.mxu0 0
      %629 = vmatpush2.bf16.msra.mxu0 0
      %630 = vmatprep.subr.bf16.mxu0 0
      %631 = vmatpush2.bf16.msra.mxu0 0
      %632 = vmatprep.subr.bf16.mxu0 0
      %633 = vmatpush2.bf16.msra.mxu0 0
      %634 = vmatprep.subr.bf16.mxu0 0
      %635 = vmatpush2.bf16.msra.mxu0 0
      %636 = vmatprep.subr.bf16.mxu0 0
      %637 = vmatpush2.bf16.msra.mxu0 0
      %638 = vmatprep.subr.bf16.mxu0 0
      %639 = vmatpush2.bf16.msra.mxu0 0
      %640 = vmatprep.mubr.bf16.mxu0 0
      %641 = vmatmul.mubr.bf16.gmra.mxu0 %v506
      %v642 = vpop.f32.mrf.mxu0
      %v643 = vadd.f32 0.0, %v642
      %v644 = vpop.f32.mrf.mxu0
      %v645 = vpop.f32.mrf.mxu0
      %v646 = vadd.f32 0.0, %v645
      %v647 = vpop.f32.mrf.mxu0
      %648 = vmatprep.mubr.bf16.mxu0 0
      %649 = vmatmul.mubr.bf16.gmra.mxu0 %v509
      %v650 = vpop.f32.mrf.mxu0
      %v651 = vadd.f32 0.0, %v650
      %v652 = vpop.f32.mrf.mxu0
      %v653 = vpop.f32.mrf.mxu0
      %v654 = vadd.f32 0.0, %v653
      %v655 = vpop.f32.mrf.mxu0
      %656 = vmatprep.mubr.bf16.mxu0 0
      %657 = vmatmul.mubr.bf16.gmra.mxu0 %v512
      %v658 = vpop.f32.mrf.mxu0
      %v659 = vadd.f32 0.0, %v658
      %v660 = vpop.f32.mrf.mxu0
      %v661 = vpop.f32.mrf.mxu0
      %v662 = vadd.f32 0.0, %v661
      %v663 = vpop.f32.mrf.mxu0
      %664 = vmatprep.mubr.bf16.mxu0 0
      %665 = vmatmul.mubr.bf16.gmra.mxu0 %v515
      %v666 = vpop.f32.mrf.mxu0
      %v667 = vadd.f32 0.0, %v666
      %v668 = vpop.f32.mrf.mxu0
      %v669 = vpop.f32.mrf.mxu0
      %v670 = vadd.f32 0.0, %v669
      %v671 = vpop.f32.mrf.mxu0
      %672 = vmatprep.mubr.bf16.mxu0 0
      %673 = vmatmul.mubr.bf16.gmra.mxu0 %v518
      %v674 = vpop.f32.mrf.mxu0
      %v675 = vadd.f32 0.0, %v674
      %v676 = vpop.f32.mrf.mxu0
      %v677 = vpop.f32.mrf.mxu0
      %v678 = vadd.f32 0.0, %v677
      %v679 = vpop.f32.mrf.mxu0
      %680 = vmatprep.mubr.bf16.mxu0 0
      %681 = vmatmul.mubr.bf16.gmra.mxu0 %v521
      %v682 = vpop.f32.mrf.mxu0
      %v683 = vadd.f32 0.0, %v682
      %v684 = vpop.f32.mrf.mxu0
      %v685 = vpop.f32.mrf.mxu0
      %v686 = vadd.f32 0.0, %v685
      %v687 = vpop.f32.mrf.mxu0
      %688 = vmatprep.mubr.bf16.mxu0 0
      %689 = vmatmul.mubr.bf16.gmra.mxu0 %v524
      %v690 = vpop.f32.mrf.mxu0
      %v691 = vadd.f32 0.0, %v690
      %v692 = vpop.f32.mrf.mxu0
      %v693 = vpop.f32.mrf.mxu0
      %v694 = vadd.f32 0.0, %v693
      %v695 = vpop.f32.mrf.mxu0
      %696 = vmatprep.mubr.bf16.mxu0 0
      %697 = vmatmul.mubr.bf16.gmra.mxu0 %v527
      %v698 = vpop.f32.mrf.mxu0
      %v699 = vadd.f32 0.0, %v698
      %v700 = vpop.f32.mrf.mxu0
      %v701 = vpop.f32.mrf.mxu0
      %v702 = vadd.f32 0.0, %v701
      %v703 = vpop.f32.mrf.mxu0
      %704 = vmatprep.mubr.bf16.mxu0 0
      %705 = vmatmul.mubr.bf16.gmra.mxu0 %v530
      %v706 = vpop.f32.mrf.mxu0
      %v707 = vadd.f32 0.0, %v706
      %v708 = vpop.f32.mrf.mxu0
      %v709 = vpop.f32.mrf.mxu0
      %v710 = vadd.f32 0.0, %v709
      %v711 = vpop.f32.mrf.mxu0
      %712 = vmatprep.mubr.bf16.mxu0 0
      %713 = vmatmul.mubr.bf16.gmra.mxu0 %v533
      %v714 = vpop.f32.mrf.mxu0
      %v715 = vadd.f32 0.0, %v714
      %v716 = vpop.f32.mrf.mxu0
      %v717 = vpop.f32.mrf.mxu0
      %v718 = vadd.f32 0.0, %v717
      %v719 = vpop.f32.mrf.mxu0
      %720 = vmatprep.mubr.bf16.mxu0 0
      %721 = vmatmul.mubr.bf16.gmra.mxu0 %v536
      %v722 = vpop.f32.mrf.mxu0
      %v723 = vadd.f32 0.0, %v722
      %v724 = vpop.f32.mrf.mxu0
      %v725 = vpop.f32.mrf.mxu0
      %v726 = vadd.f32 0.0, %v725
      %v727 = vpop.f32.mrf.mxu0
      %728 = vmatprep.mubr.bf16.mxu0 0
      %729 = vmatmul.mubr.bf16.gmra.mxu0 %v539
      %v730 = vpop.f32.mrf.mxu0
      %v731 = vadd.f32 0.0, %v730
      %v732 = vpop.f32.mrf.mxu0
      %v733 = vpop.f32.mrf.mxu0
      %v734 = vadd.f32 0.0, %v733
      %v735 = vpop.f32.mrf.mxu0
      %736 = vmatprep.mubr.bf16.mxu0 0
      %737 = vmatmul.mubr.bf16.gmra.mxu0 %v542
      %v738 = vpop.f32.mrf.mxu0
      %v739 = vadd.f32 0.0, %v738
      %v740 = vpop.f32.mrf.mxu0
      %v741 = vpop.f32.mrf.mxu0
      %v742 = vadd.f32 0.0, %v741
      %v743 = vpop.f32.mrf.mxu0
      %744 = vmatprep.mubr.bf16.mxu0 0
      %745 = vmatmul.mubr.bf16.gmra.mxu0 %v545
      %v746 = vpop.f32.mrf.mxu0
      %v747 = vadd.f32 0.0, %v746
      %v748 = vpop.f32.mrf.mxu0
      %v749 = vpop.f32.mrf.mxu0
      %v750 = vadd.f32 0.0, %v749
      %v751 = vpop.f32.mrf.mxu0
      %752 = vmatprep.mubr.bf16.mxu0 0
      %753 = vmatmul.mubr.bf16.gmra.mxu0 %v548
      %v754 = vpop.f32.mrf.mxu0
      %v755 = vadd.f32 0.0, %v754
      %v756 = vpop.f32.mrf.mxu0
      %v757 = vpop.f32.mrf.mxu0
      %v758 = vadd.f32 0.0, %v757
      %v759 = vpop.f32.mrf.mxu0
      %760 = vmatprep.mubr.bf16.mxu0 0
      %761 = vmatmul.mubr.bf16.gmra.mxu0 %v551
      %v762 = vpop.f32.mrf.mxu0
      %v763 = vadd.f32 0.0, %v762
      %v764 = vpop.f32.mrf.mxu0
      %v765 = vpop.f32.mrf.mxu0
      %v766 = vadd.f32 0.0, %v765
      %v767 = vpop.f32.mrf.mxu0
      %768 = vmatprep.mubr.bf16.mxu0 0
      %769 = vmatmul.mubr.bf16.gmra.mxu0 %v554
      %v770 = vpop.f32.mrf.mxu0
      %v771 = vadd.f32 0.0, %v770
      %v772 = vpop.f32.mrf.mxu0
      %v773 = vpop.f32.mrf.mxu0
      %v774 = vadd.f32 0.0, %v773
      %v775 = vpop.f32.mrf.mxu0
      %776 = vmatprep.mubr.bf16.mxu0 0
      %777 = vmatmul.mubr.bf16.gmra.mxu0 %v557
      %v778 = vpop.f32.mrf.mxu0
      %v779 = vadd.f32 0.0, %v778
      %v780 = vpop.f32.mrf.mxu0
      %v781 = vpop.f32.mrf.mxu0
      %v782 = vadd.f32 0.0, %v781
      %v783 = vpop.f32.mrf.mxu0
      %784 = vmatprep.mubr.bf16.mxu0 0
      %785 = vmatmul.mubr.bf16.gmra.mxu0 %v560
      %v786 = vpop.f32.mrf.mxu0
      %v787 = vadd.f32 0.0, %v786
      %v788 = vpop.f32.mrf.mxu0
      %v789 = vpop.f32.mrf.mxu0
      %v790 = vadd.f32 0.0, %v789
      %v791 = vpop.f32.mrf.mxu0
      %792 = vmatprep.mubr.bf16.mxu0 0
      %793 = vmatmul.mubr.bf16.gmra.mxu0 %v563
      %v794 = vpop.f32.mrf.mxu0
      %v795 = vadd.f32 0.0, %v794
      %v796 = vpop.f32.mrf.mxu0
      %v797 = vpop.f32.mrf.mxu0
      %v798 = vadd.f32 0.0, %v797
      %v799 = vpop.f32.mrf.mxu0
      %800 = vmatprep.mubr.bf16.mxu0 0
      %801 = vmatmul.mubr.bf16.gmra.mxu0 %v566
      %v802 = vpop.f32.mrf.mxu0
      %v803 = vadd.f32 0.0, %v802
      %v804 = vpop.f32.mrf.mxu0
      %v805 = vpop.f32.mrf.mxu0
      %v806 = vadd.f32 0.0, %v805
      %v807 = vpop.f32.mrf.mxu0
      %808 = vmatprep.mubr.bf16.mxu0 0
      %809 = vmatmul.mubr.bf16.gmra.mxu0 %v569
      %v810 = vpop.f32.mrf.mxu0
      %v811 = vadd.f32 0.0, %v810
      %v812 = vpop.f32.mrf.mxu0
      %v813 = vpop.f32.mrf.mxu0
      %v814 = vadd.f32 0.0, %v813
      %v815 = vpop.f32.mrf.mxu0
      %816 = vmatprep.mubr.bf16.mxu0 0
      %817 = vmatmul.mubr.bf16.gmra.mxu0 %v572
      %v818 = vpop.f32.mrf.mxu0
      %v819 = vadd.f32 0.0, %v818
      %v820 = vpop.f32.mrf.mxu0
      %v821 = vpop.f32.mrf.mxu0
      %v822 = vadd.f32 0.0, %v821
      %v823 = vpop.f32.mrf.mxu0
      %824 = vmatprep.mubr.bf16.mxu0 0
      %825 = vmatmul.mubr.bf16.gmra.mxu0 %v575
      %v826 = vpop.f32.mrf.mxu0
      %v827 = vadd.f32 0.0, %v826
      %v828 = vpop.f32.mrf.mxu0
      %v829 = vpop.f32.mrf.mxu0
      %v830 = vadd.f32 0.0, %v829
      %v831 = vpop.f32.mrf.mxu0
      %832 = vmatprep.mubr.bf16.mxu0 0
      %833 = vmatmul.mubr.bf16.gmra.mxu0 %v578
      %v834 = vpop.f32.mrf.mxu0
      %v835 = vadd.f32 0.0, %v834
      %v836 = vpop.f32.mrf.mxu0
      %v837 = vpop.f32.mrf.mxu0
      %v838 = vadd.f32 0.0, %v837
      %v839 = vpop.f32.mrf.mxu0
      %840 = vmatprep.mubr.bf16.mxu0 0
      %841 = vmatmul.mubr.bf16.gmra.mxu0 %v581
      %v842 = vpop.f32.mrf.mxu0
      %v843 = vadd.f32 0.0, %v842
      %v844 = vpop.f32.mrf.mxu0
      %v845 = vpop.f32.mrf.mxu0
      %v846 = vadd.f32 0.0, %v845
      %v847 = vpop.f32.mrf.mxu0
      %848 = vmatprep.mubr.bf16.mxu0 0
      %849 = vmatmul.mubr.bf16.gmra.mxu0 %v584
      %v850 = vpop.f32.mrf.mxu0
      %v851 = vadd.f32 0.0, %v850
      %v852 = vpop.f32.mrf.mxu0
      %v853 = vpop.f32.mrf.mxu0
      %v854 = vadd.f32 0.0, %v853
      %v855 = vpop.f32.mrf.mxu0
      %856 = vmatprep.mubr.bf16.mxu0 0
      %857 = vmatmul.mubr.bf16.gmra.mxu0 %v587
      %v858 = vpop.f32.mrf.mxu0
      %v859 = vadd.f32 0.0, %v858
      %v860 = vpop.f32.mrf.mxu0
      %v861 = vpop.f32.mrf.mxu0
      %v862 = vadd.f32 0.0, %v861
      %v863 = vpop.f32.mrf.mxu0
      %864 = vmatprep.mubr.bf16.mxu0 0
      %865 = vmatmul.mubr.bf16.gmra.mxu0 %v590
      %v866 = vpop.f32.mrf.mxu0
      %v867 = vadd.f32 0.0, %v866
      %v868 = vpop.f32.mrf.mxu0
      %v869 = vpop.f32.mrf.mxu0
      %v870 = vadd.f32 0.0, %v869
      %v871 = vpop.f32.mrf.mxu0
      %872 = vmatprep.mubr.bf16.mxu0 0
      %873 = vmatmul.mubr.bf16.gmra.mxu0 %v593
      %v874 = vpop.f32.mrf.mxu0
      %v875 = vadd.f32 0.0, %v874
      %v876 = vpop.f32.mrf.mxu0
      %v877 = vpop.f32.mrf.mxu0
      %v878 = vadd.f32 0.0, %v877
      %v879 = vpop.f32.mrf.mxu0
      %880 = vmatprep.mubr.bf16.mxu0 0
      %881 = vmatmul.mubr.bf16.gmra.mxu0 %v596
      %v882 = vpop.f32.mrf.mxu0
      %v883 = vadd.f32 0.0, %v882
      %v884 = vpop.f32.mrf.mxu0
      %v885 = vpop.f32.mrf.mxu0
      %v886 = vadd.f32 0.0, %v885
      %v887 = vpop.f32.mrf.mxu0
      %888 = vmatprep.mubr.bf16.mxu0 0
      %889 = vmatmul.mubr.bf16.gmra.mxu0 %v599
      %v890 = vpop.f32.mrf.mxu0
      %v891 = vadd.f32 0.0, %v890
      %v892 = vpop.f32.mrf.mxu0
      %v893 = vpop.f32.mrf.mxu0
      %v894 = vadd.f32 0.0, %v893
      %v895 = vpop.f32.mrf.mxu0
      %896 = vdwg.mxu0
      %v897 = vadd.f32 %v329, %v643
      %v898 = vadd.f32 %v330, %v646
      %v899 = vadd.f32 %v331, %v651
      %v900 = vadd.f32 %v332, %v654
      %v901 = vadd.f32 %v333, %v659
      %v902 = vadd.f32 %v334, %v662
      %v903 = vadd.f32 %v335, %v667
      %v904 = vadd.f32 %v336, %v670
      %v905 = vadd.f32 %v337, %v675
      %v906 = vadd.f32 %v338, %v678
      %v907 = vadd.f32 %v339, %v683
      %v908 = vadd.f32 %v340, %v686
      %v909 = vadd.f32 %v341, %v691
      %v910 = vadd.f32 %v342, %v694
      %v911 = vadd.f32 %v343, %v699
      %v912 = vadd.f32 %v344, %v702
      %v913 = vadd.f32 %v345, %v707
      %v914 = vadd.f32 %v346, %v710
      %v915 = vadd.f32 %v347, %v715
      %v916 = vadd.f32 %v348, %v718
      %v917 = vadd.f32 %v349, %v723
      %v918 = vadd.f32 %v350, %v726
      %v919 = vadd.f32 %v351, %v731
      %v920 = vadd.f32 %v352, %v734
      %v921 = vadd.f32 %v353, %v739
      %v922 = vadd.f32 %v354, %v742
      %v923 = vadd.f32 %v355, %v747
      %v924 = vadd.f32 %v356, %v750
      %v925 = vadd.f32 %v357, %v755
      %v926 = vadd.f32 %v358, %v758
      %v927 = vadd.f32 %v359, %v763
      %v928 = vadd.f32 %v360, %v766
      %v929 = vadd.f32 %v361, %v771
      %v930 = vadd.f32 %v362, %v774
      %v931 = vadd.f32 %v363, %v779
      %v932 = vadd.f32 %v364, %v782
      %v933 = vadd.f32 %v365, %v787
      %v934 = vadd.f32 %v366, %v790
      %v935 = vadd.f32 %v367, %v795
      %v936 = vadd.f32 %v368, %v798
      %v937 = vadd.f32 %v369, %v803
      %v938 = vadd.f32 %v370, %v806
      %v939 = vadd.f32 %v371, %v811
      %v940 = vadd.f32 %v372, %v814
      %v941 = vadd.f32 %v373, %v819
      %v942 = vadd.f32 %v374, %v822
      %v943 = vadd.f32 %v375, %v827
      %v944 = vadd.f32 %v376, %v830
      %v945 = vadd.f32 %v377, %v835
      %v946 = vadd.f32 %v378, %v838
      %v947 = vadd.f32 %v379, %v843
      %v948 = vadd.f32 %v380, %v846
      %v949 = vadd.f32 %v381, %v851
      %v950 = vadd.f32 %v382, %v854
      %v951 = vadd.f32 %v383, %v859
      %v952 = vadd.f32 %v384, %v862
      %v953 = vadd.f32 %v385, %v867
      %v954 = vadd.f32 %v386, %v870
      %v955 = vadd.f32 %v387, %v875
      %v956 = vadd.f32 %v388, %v878
      %v957 = vadd.f32 %v389, %v883
      %v958 = vadd.f32 %v390, %v886
      %v959 = vadd.f32 %v391, %v891
      %v960 = vadd.f32 %v392, %v894
      %vm961 = vcmask 261120
      %962 = vst.msk [vmem:[#allocation2] sm:$0xff] %vm961, %v897
      %963 = vst.msk [vmem:[#allocation2 + $0x8] sm:$0xff] %vm961, %v898
      %964 = vst.msk [vmem:[#allocation2 + $0x10] sm:$0xff] %vm961, %v899
      %965 = vst.msk [vmem:[#allocation2 + $0x18] sm:$0xff] %vm961, %v900
      %966 = vst.msk [vmem:[#allocation2 + $0x20] sm:$0xff] %vm961, %v901
      %967 = vst.msk [vmem:[#allocation2 + $0x28] sm:$0xff] %vm961, %v902
      %968 = vst.msk [vmem:[#allocation2 + $0x30] sm:$0xff] %vm961, %v903
      %969 = vst.msk [vmem:[#allocation2 + $0x38] sm:$0xff] %vm961, %v904
      %970 = vst.msk [vmem:[#allocation2 + $0x40] sm:$0xff] %vm961, %v905
      %971 = vst.msk [vmem:[#allocation2 + $0x48] sm:$0xff] %vm961, %v906
      %972 = vst.msk [vmem:[#allocation2 + $0x50] sm:$0xff] %vm961, %v907
      %973 = vst.msk [vmem:[#allocation2 + $0x58] sm:$0xff] %vm961, %v908
      %974 = vst.msk [vmem:[#allocation2 + $0x60] sm:$0xff] %vm961, %v909
      %975 = vst.msk [vmem:[#allocation2 + $0x68] sm:$0xff] %vm961, %v910
      %976 = vst.msk [vmem:[#allocation2 + $0x70] sm:$0xff] %vm961, %v911
      %977 = vst.msk [vmem:[#allocation2 + $0x78] sm:$0xff] %vm961, %v912
      %978 = vst.msk [vmem:[#allocation2 + $0x80] sm:$0xff] %vm961, %v913
      %979 = vst.msk [vmem:[#allocation2 + $0x88] sm:$0xff] %vm961, %v914
      %980 = vst.msk [vmem:[#allocation2 + $0x90] sm:$0xff] %vm961, %v915
      %981 = vst.msk [vmem:[#allocation2 + $0x98] sm:$0xff] %vm961, %v916
      %982 = vst.msk [vmem:[#allocation2 + $0xa0] sm:$0xff] %vm961, %v917
      %983 = vst.msk [vmem:[#allocation2 + $0xa8] sm:$0xff] %vm961, %v918
      %984 = vst.msk [vmem:[#allocation2 + $0xb0] sm:$0xff] %vm961, %v919
      %985 = vst.msk [vmem:[#allocation2 + $0xb8] sm:$0xff] %vm961, %v920
      %986 = vst.msk [vmem:[#allocation2 + $0xc0] sm:$0xff] %vm961, %v921
      %987 = vst.msk [vmem:[#allocation2 + $0xc8] sm:$0xff] %vm961, %v922
      %988 = vst.msk [vmem:[#allocation2 + $0xd0] sm:$0xff] %vm961, %v923
      %989 = vst.msk [vmem:[#allocation2 + $0xd8] sm:$0xff] %vm961, %v924
      %990 = vst.msk [vmem:[#allocation2 + $0xe0] sm:$0xff] %vm961, %v925
      %991 = vst.msk [vmem:[#allocation2 + $0xe8] sm:$0xff] %vm961, %v926
      %992 = vst.msk [vmem:[#allocation2 + $0xf0] sm:$0xff] %vm961, %v927
      %993 = vst.msk [vmem:[#allocation2 + $0xf8] sm:$0xff] %vm961, %v928
      %994 = vst.msk [vmem:[#allocation2 + $0x100] sm:$0xff] %vm961, %v929
      %995 = vst.msk [vmem:[#allocation2 + $0x108] sm:$0xff] %vm961, %v930
      %996 = vst.msk [vmem:[#allocation2 + $0x110] sm:$0xff] %vm961, %v931
      %997 = vst.msk [vmem:[#allocation2 + $0x118] sm:$0xff] %vm961, %v932
      %998 = vst.msk [vmem:[#allocation2 + $0x120] sm:$0xff] %vm961, %v933
      %999 = vst.msk [vmem:[#allocation2 + $0x128] sm:$0xff] %vm961, %v934
      %1000 = vst.msk [vmem:[#allocation2 + $0x130] sm:$0xff] %vm961, %v935
      %1001 = vst.msk [vmem:[#allocation2 + $0x138] sm:$0xff] %vm961, %v936
      %1002 = vst.msk [vmem:[#allocation2 + $0x140] sm:$0xff] %vm961, %v937
      %1003 = vst.msk [vmem:[#allocation2 + $0x148] sm:$0xff] %vm961, %v938
      %1004 = vst.msk [vmem:[#allocation2 + $0x150] sm:$0xff] %vm961, %v939
      %1005 = vst.msk [vmem:[#allocation2 + $0x158] sm:$0xff] %vm961, %v940
      %1006 = vst.msk [vmem:[#allocation2 + $0x160] sm:$0xff] %vm961, %v941
      %1007 = vst.msk [vmem:[#allocation2 + $0x168] sm:$0xff] %vm961, %v942
      %1008 = vst.msk [vmem:[#allocation2 + $0x170] sm:$0xff] %vm961, %v943
      %1009 = vst.msk [vmem:[#allocation2 + $0x178] sm:$0xff] %vm961, %v944
      %1010 = vst.msk [vmem:[#allocation2 + $0x180] sm:$0xff] %vm961, %v945
      %1011 = vst.msk [vmem:[#allocation2 + $0x188] sm:$0xff] %vm961, %v946
      %1012 = vst.msk [vmem:[#allocation2 + $0x190] sm:$0xff] %vm961, %v947
      %1013 = vst.msk [vmem:[#allocation2 + $0x198] sm:$0xff] %vm961, %v948
      %1014 = vst.msk [vmem:[#allocation2 + $0x1a0] sm:$0xff] %vm961, %v949
      %1015 = vst.msk [vmem:[#allocation2 + $0x1a8] sm:$0xff] %vm961, %v950
      %1016 = vst.msk [vmem:[#allocation2 + $0x1b0] sm:$0xff] %vm961, %v951
      %1017 = vst.msk [vmem:[#allocation2 + $0x1b8] sm:$0xff] %vm961, %v952
      %1018 = vst.msk [vmem:[#allocation2 + $0x1c0] sm:$0xff] %vm961, %v953
      %1019 = vst.msk [vmem:[#allocation2 + $0x1c8] sm:$0xff] %vm961, %v954
      %1020 = vst.msk [vmem:[#allocation2 + $0x1d0] sm:$0xff] %vm961, %v955
      %1021 = vst.msk [vmem:[#allocation2 + $0x1d8] sm:$0xff] %vm961, %v956
      %1022 = vst.msk [vmem:[#allocation2 + $0x1e0] sm:$0xff] %vm961, %v957
      %1023 = vst.msk [vmem:[#allocation2 + $0x1e8] sm:$0xff] %vm961, %v958
      %1024 = vst.msk [vmem:[#allocation2 + $0x1f0] sm:$0xff] %vm961, %v959
      %1025 = vst.msk [vmem:[#allocation2 + $0x1f8] sm:$0xff] %vm961, %v960
      // Predicated region
      $region37: #{tpu_custom_call.1} parent=31 // pred_check
        %p1026 = pneg %p260
      $region38: #{tpu_custom_call.1} parent=31 // pred_check_branch
        %1028 = sbr.rel (%p1026) target = $region40
      $region39: #{tpu_custom_call.1} parent=31 // pred_region
        %v1029 = vld [vmem:[#allocation2] sm:$0xff]
        %v1030 = vld [vmem:[#allocation2 + $0x8] sm:$0xff]
        %v1031 = vld [vmem:[#allocation2 + $0x10] sm:$0xff]
        %v1032 = vld [vmem:[#allocation2 + $0x18] sm:$0xff]
        %v1033 = vld [vmem:[#allocation2 + $0x20] sm:$0xff]
        %v1034 = vld [vmem:[#allocation2 + $0x28] sm:$0xff]
        %v1035 = vld [vmem:[#allocation2 + $0x30] sm:$0xff]
        %v1036 = vld [vmem:[#allocation2 + $0x38] sm:$0xff]
        %v1037 = vld [vmem:[#allocation2 + $0x40] sm:$0xff]
        %v1038 = vld [vmem:[#allocation2 + $0x48] sm:$0xff]
        %v1039 = vld [vmem:[#allocation2 + $0x50] sm:$0xff]
        %v1040 = vld [vmem:[#allocation2 + $0x58] sm:$0xff]
        %v1041 = vld [vmem:[#allocation2 + $0x60] sm:$0xff]
        %v1042 = vld [vmem:[#allocation2 + $0x68] sm:$0xff]
        %v1043 = vld [vmem:[#allocation2 + $0x70] sm:$0xff]
        %v1044 = vld [vmem:[#allocation2 + $0x78] sm:$0xff]
        %v1045 = vld [vmem:[#allocation2 + $0x80] sm:$0xff]
        %v1046 = vld [vmem:[#allocation2 + $0x88] sm:$0xff]
        %v1047 = vld [vmem:[#allocation2 + $0x90] sm:$0xff]
        %v1048 = vld [vmem:[#allocation2 + $0x98] sm:$0xff]
        %v1049 = vld [vmem:[#allocation2 + $0xa0] sm:$0xff]
        %v1050 = vld [vmem:[#allocation2 + $0xa8] sm:$0xff]
        %v1051 = vld [vmem:[#allocation2 + $0xb0] sm:$0xff]
        %v1052 = vld [vmem:[#allocation2 + $0xb8] sm:$0xff]
        %v1053 = vld [vmem:[#allocation2 + $0xc0] sm:$0xff]
        %v1054 = vld [vmem:[#allocation2 + $0xc8] sm:$0xff]
        %v1055 = vld [vmem:[#allocation2 + $0xd0] sm:$0xff]
        %v1056 = vld [vmem:[#allocation2 + $0xd8] sm:$0xff]
        %v1057 = vld [vmem:[#allocation2 + $0xe0] sm:$0xff]
        %v1058 = vld [vmem:[#allocation2 + $0xe8] sm:$0xff]
        %v1059 = vld [vmem:[#allocation2 + $0xf0] sm:$0xff]
        %v1060 = vld [vmem:[#allocation2 + $0xf8] sm:$0xff]
        %v1061 = vld [vmem:[#allocation2 + $0x100] sm:$0xff]
        %v1062 = vld [vmem:[#allocation2 + $0x108] sm:$0xff]
        %v1063 = vld [vmem:[#allocation2 + $0x110] sm:$0xff]
        %v1064 = vld [vmem:[#allocation2 + $0x118] sm:$0xff]
        %v1065 = vld [vmem:[#allocation2 + $0x120] sm:$0xff]
        %v1066 = vld [vmem:[#allocation2 + $0x128] sm:$0xff]
        %v1067 = vld [vmem:[#allocation2 + $0x130] sm:$0xff]
        %v1068 = vld [vmem:[#allocation2 + $0x138] sm:$0xff]
        %v1069 = vld [vmem:[#allocation2 + $0x140] sm:$0xff]
        %v1070 = vld [vmem:[#allocation2 + $0x148] sm:$0xff]
        %v1071 = vld [vmem:[#allocation2 + $0x150] sm:$0xff]
        %v1072 = vld [vmem:[#allocation2 + $0x158] sm:$0xff]
        %v1073 = vld [vmem:[#allocation2 + $0x160] sm:$0xff]
        %v1074 = vld [vmem:[#allocation2 + $0x168] sm:$0xff]
        %v1075 = vld [vmem:[#allocation2 + $0x170] sm:$0xff]
        %v1076 = vld [vmem:[#allocation2 + $0x178] sm:$0xff]
        %v1077 = vld [vmem:[#allocation2 + $0x180] sm:$0xff]
        %v1078 = vld [vmem:[#allocation2 + $0x188] sm:$0xff]
        %v1079 = vld [vmem:[#allocation2 + $0x190] sm:$0xff]
        %v1080 = vld [vmem:[#allocation2 + $0x198] sm:$0xff]
        %v1081 = vld [vmem:[#allocation2 + $0x1a0] sm:$0xff]
        %v1082 = vld [vmem:[#allocation2 + $0x1a8] sm:$0xff]
        %v1083 = vld [vmem:[#allocation2 + $0x1b0] sm:$0xff]
        %v1084 = vld [vmem:[#allocation2 + $0x1b8] sm:$0xff]
        %v1085 = vld [vmem:[#allocation2 + $0x1c0] sm:$0xff]
        %v1086 = vld [vmem:[#allocation2 + $0x1c8] sm:$0xff]
        %v1087 = vld [vmem:[#allocation2 + $0x1d0] sm:$0xff]
        %v1088 = vld [vmem:[#allocation2 + $0x1d8] sm:$0xff]
        %v1089 = vld [vmem:[#allocation2 + $0x1e0] sm:$0xff]
        %v1090 = vld [vmem:[#allocation2 + $0x1e8] sm:$0xff]
        %v1091 = vld [vmem:[#allocation2 + $0x1f0] sm:$0xff]
        %v1092 = vld [vmem:[#allocation2 + $0x1f8] sm:$0xff]
        %v1093 = vld [vmem:[%s249] sm:$0x1]
        %v1095 = vlaneseq
        %v1096 = vshrl.u32 %v1095, 7
        %v1097 = vsub.s32 0, %v1096
        %v1098 = vrot.slane %v1093, %v1097
        %v1100 = vadd.f32 %v1029, %v1098
        %v1101 = vadd.f32 %v1030, %v1098
        %v1102 = vadd.f32 %v1031, %v1098
        %v1103 = vadd.f32 %v1032, %v1098
        %v1104 = vadd.f32 %v1033, %v1098
        %v1105 = vadd.f32 %v1034, %v1098
        %v1106 = vadd.f32 %v1035, %v1098
        %v1107 = vadd.f32 %v1036, %v1098
        %v1108 = vadd.f32 %v1037, %v1098
        %v1109 = vadd.f32 %v1038, %v1098
        %v1110 = vadd.f32 %v1039, %v1098
        %v1111 = vadd.f32 %v1040, %v1098
        %v1112 = vadd.f32 %v1041, %v1098
        %v1113 = vadd.f32 %v1042, %v1098
        %v1114 = vadd.f32 %v1043, %v1098
        %v1115 = vadd.f32 %v1044, %v1098
        %v1116 = vadd.f32 %v1045, %v1098
        %v1117 = vadd.f32 %v1046, %v1098
        %v1118 = vadd.f32 %v1047, %v1098
        %v1119 = vadd.f32 %v1048, %v1098
        %v1120 = vadd.f32 %v1049, %v1098
        %v1121 = vadd.f32 %v1050, %v1098
        %v1122 = vadd.f32 %v1051, %v1098
        %v1123 = vadd.f32 %v1052, %v1098
        %v1124 = vadd.f32 %v1053, %v1098
        %v1125 = vadd.f32 %v1054, %v1098
        %v1126 = vadd.f32 %v1055, %v1098
        %v1127 = vadd.f32 %v1056, %v1098
        %v1128 = vadd.f32 %v1057, %v1098
        %v1129 = vadd.f32 %v1058, %v1098
        %v1130 = vadd.f32 %v1059, %v1098
        %v1131 = vadd.f32 %v1060, %v1098
        %v1132 = vadd.f32 %v1061, %v1098
        %v1133 = vadd.f32 %v1062, %v1098
        %v1134 = vadd.f32 %v1063, %v1098
        %v1135 = vadd.f32 %v1064, %v1098
        %v1136 = vadd.f32 %v1065, %v1098
        %v1137 = vadd.f32 %v1066, %v1098
        %v1138 = vadd.f32 %v1067, %v1098
        %v1139 = vadd.f32 %v1068, %v1098
        %v1140 = vadd.f32 %v1069, %v1098
        %v1141 = vadd.f32 %v1070, %v1098
        %v1142 = vadd.f32 %v1071, %v1098
        %v1143 = vadd.f32 %v1072, %v1098
        %v1144 = vadd.f32 %v1073, %v1098
        %v1145 = vadd.f32 %v1074, %v1098
        %v1146 = vadd.f32 %v1075, %v1098
        %v1147 = vadd.f32 %v1076, %v1098
        %v1148 = vadd.f32 %v1077, %v1098
        %v1149 = vadd.f32 %v1078, %v1098
        %v1150 = vadd.f32 %v1079, %v1098
        %v1151 = vadd.f32 %v1080, %v1098
        %v1152 = vadd.f32 %v1081, %v1098
        %v1153 = vadd.f32 %v1082, %v1098
        %v1154 = vadd.f32 %v1083, %v1098
        %v1155 = vadd.f32 %v1084, %v1098
        %v1156 = vadd.f32 %v1085, %v1098
        %v1157 = vadd.f32 %v1086, %v1098
        %v1158 = vadd.f32 %v1087, %v1098
        %v1159 = vadd.f32 %v1088, %v1098
        %v1160 = vadd.f32 %v1089, %v1098
        %v1161 = vadd.f32 %v1090, %v1098
        %v1162 = vadd.f32 %v1091, %v1098
        %v1163 = vadd.f32 %v1092, %v1098
        %1164 = vst.msk [vmem:[%s257] sm:$0xff] %vm961, %v1100
        %1165 = vst.msk [vmem:[%s257 + $0x8] sm:$0xff] %vm961, %v1101
        %1166 = vst.msk [vmem:[%s257 + $0x10] sm:$0xff] %vm961, %v1102
        %1167 = vst.msk [vmem:[%s257 + $0x18] sm:$0xff] %vm961, %v1103
        %1168 = vst.msk [vmem:[%s257 + $0x20] sm:$0xff] %vm961, %v1104
        %1169 = vst.msk [vmem:[%s257 + $0x28] sm:$0xff] %vm961, %v1105
        %1170 = vst.msk [vmem:[%s257 + $0x30] sm:$0xff] %vm961, %v1106
        %1171 = vst.msk [vmem:[%s257 + $0x38] sm:$0xff] %vm961, %v1107
        %1172 = vst.msk [vmem:[%s257 + $0x40] sm:$0xff] %vm961, %v1108
        %1173 = vst.msk [vmem:[%s257 + $0x48] sm:$0xff] %vm961, %v1109
        %1174 = vst.msk [vmem:[%s257 + $0x50] sm:$0xff] %vm961, %v1110
        %1175 = vst.msk [vmem:[%s257 + $0x58] sm:$0xff] %vm961, %v1111
        %1176 = vst.msk [vmem:[%s257 + $0x60] sm:$0xff] %vm961, %v1112
        %1177 = vst.msk [vmem:[%s257 + $0x68] sm:$0xff] %vm961, %v1113
        %1178 = vst.msk [vmem:[%s257 + $0x70] sm:$0xff] %vm961, %v1114
        %1179 = vst.msk [vmem:[%s257 + $0x78] sm:$0xff] %vm961, %v1115
        %1180 = vst.msk [vmem:[%s257 + $0x80] sm:$0xff] %vm961, %v1116
        %1181 = vst.msk [vmem:[%s257 + $0x88] sm:$0xff] %vm961, %v1117
        %1182 = vst.msk [vmem:[%s257 + $0x90] sm:$0xff] %vm961, %v1118
        %1183 = vst.msk [vmem:[%s257 + $0x98] sm:$0xff] %vm961, %v1119
        %1184 = vst.msk [vmem:[%s257 + $0xa0] sm:$0xff] %vm961, %v1120
        %1185 = vst.msk [vmem:[%s257 + $0xa8] sm:$0xff] %vm961, %v1121
        %1186 = vst.msk [vmem:[%s257 + $0xb0] sm:$0xff] %vm961, %v1122
        %1187 = vst.msk [vmem:[%s257 + $0xb8] sm:$0xff] %vm961, %v1123
        %1188 = vst.msk [vmem:[%s257 + $0xc0] sm:$0xff] %vm961, %v1124
        %1189 = vst.msk [vmem:[%s257 + $0xc8] sm:$0xff] %vm961, %v1125
        %1190 = vst.msk [vmem:[%s257 + $0xd0] sm:$0xff] %vm961, %v1126
        %1191 = vst.msk [vmem:[%s257 + $0xd8] sm:$0xff] %vm961, %v1127
        %1192 = vst.msk [vmem:[%s257 + $0xe0] sm:$0xff] %vm961, %v1128
        %1193 = vst.msk [vmem:[%s257 + $0xe8] sm:$0xff] %vm961, %v1129
        %1194 = vst.msk [vmem:[%s257 + $0xf0] sm:$0xff] %vm961, %v1130
        %1195 = vst.msk [vmem:[%s257 + $0xf8] sm:$0xff] %vm961, %v1131
        %1196 = vst.msk [vmem:[%s257 + $0x100] sm:$0xff] %vm961, %v1132
        %1197 = vst.msk [vmem:[%s257 + $0x108] sm:$0xff] %vm961, %v1133
        %1198 = vst.msk [vmem:[%s257 + $0x110] sm:$0xff] %vm961, %v1134
        %1199 = vst.msk [vmem:[%s257 + $0x118] sm:$0xff] %vm961, %v1135
        %1200 = vst.msk [vmem:[%s257 + $0x120] sm:$0xff] %vm961, %v1136
        %1201 = vst.msk [vmem:[%s257 + $0x128] sm:$0xff] %vm961, %v1137
        %1202 = vst.msk [vmem:[%s257 + $0x130] sm:$0xff] %vm961, %v1138
        %1203 = vst.msk [vmem:[%s257 + $0x138] sm:$0xff] %vm961, %v1139
        %1204 = vst.msk [vmem:[%s257 + $0x140] sm:$0xff] %vm961, %v1140
        %1205 = vst.msk [vmem:[%s257 + $0x148] sm:$0xff] %vm961, %v1141
        %1206 = vst.msk [vmem:[%s257 + $0x150] sm:$0xff] %vm961, %v1142
        %1207 = vst.msk [vmem:[%s257 + $0x158] sm:$0xff] %vm961, %v1143
        %1208 = vst.msk [vmem:[%s257 + $0x160] sm:$0xff] %vm961, %v1144
        %1209 = vst.msk [vmem:[%s257 + $0x168] sm:$0xff] %vm961, %v1145
        %1210 = vst.msk [vmem:[%s257 + $0x170] sm:$0xff] %vm961, %v1146
        %1211 = vst.msk [vmem:[%s257 + $0x178] sm:$0xff] %vm961, %v1147
        %1212 = vst.msk [vmem:[%s257 + $0x180] sm:$0xff] %vm961, %v1148
        %1213 = vst.msk [vmem:[%s257 + $0x188] sm:$0xff] %vm961, %v1149
        %1214 = vst.msk [vmem:[%s257 + $0x190] sm:$0xff] %vm961, %v1150
        %1215 = vst.msk [vmem:[%s257 + $0x198] sm:$0xff] %vm961, %v1151
        %1216 = vst.msk [vmem:[%s257 + $0x1a0] sm:$0xff] %vm961, %v1152
        %1217 = vst.msk [vmem:[%s257 + $0x1a8] sm:$0xff] %vm961, %v1153
        %1218 = vst.msk [vmem:[%s257 + $0x1b0] sm:$0xff] %vm961, %v1154
        %1219 = vst.msk [vmem:[%s257 + $0x1b8] sm:$0xff] %vm961, %v1155
        %1220 = vst.msk [vmem:[%s257 + $0x1c0] sm:$0xff] %vm961, %v1156
        %1221 = vst.msk [vmem:[%s257 + $0x1c8] sm:$0xff] %vm961, %v1157
        %1222 = vst.msk [vmem:[%s257 + $0x1d0] sm:$0xff] %vm961, %v1158
        %1223 = vst.msk [vmem:[%s257 + $0x1d8] sm:$0xff] %vm961, %v1159
        %1224 = vst.msk [vmem:[%s257 + $0x1e0] sm:$0xff] %vm961, %v1160
        %1225 = vst.msk [vmem:[%s257 + $0x1e8] sm:$0xff] %vm961, %v1161
        %1226 = vst.msk [vmem:[%s257 + $0x1f0] sm:$0xff] %vm961, %v1162
        %1227 = vst.msk [vmem:[%s257 + $0x1f8] sm:$0xff] %vm961, %v1163
      $region40: #{tpu_custom_call.1} parent=31 // pred_fallthru
        _
      %s1228 = smul.u32 64, %s19
      %p1229 = scmp.lt.s32.totalorder %s1228, 1023
      %s1230 = scalar_select %p1229, %s1228, 1023
      %p1231 = scmp.lt.s32.totalorder %s20, 0
      %s1232 = scalar_select %p1231, %s20, 0
      %s1233 = sadd.s32 %s1232, %s1230
      %s1234 = smul.addr %s1233, 8
      %s1235 = scalar_lea.vmem %s3, %s1234
      // Predicated region
      $region41: #{tpu_custom_call.1} parent=31 // pred_check
        %p1236 = pneg %p135
      $region42: #{tpu_custom_call.1} parent=31 // pred_check_branch
        %1238 = sbr.rel (%p1236) target = $region44
      $region43: #{tpu_custom_call.1} parent=31 // pred_region
        %s1239 = smul.u32 64, %s19
      $region44: #{tpu_custom_call.1} parent=31 // pred_fallthru
        _
    $region32: #{tpu_custom_call.1} parent=5 // pred_fallthru
      _
    %p1240 = scmp.le.s32.totalorder 2, %s9
    // Predicated region
    $region45: #{tpu_custom_call.1} parent=5 // pred_check
      %p1241 = pneg %p1240
    $region46: #{tpu_custom_call.1} parent=5 // pred_check_branch
      %1243 = sbr.rel (%p1241) target = $region48
    $region47: #{tpu_custom_call.1} parent=5 // pred_region
      %s1244 = ssub.s32 %s9, 2
      // Predicated region
      $region49: #{tpu_custom_call.1} parent=47 // pred_check
        %p1245 = pneg %p141
      $region50: #{tpu_custom_call.1} parent=47 // pred_check_branch
        %1247 = sbr.rel (%p1245) target = $region52
      $region51: #{tpu_custom_call.1} parent=47 // pred_region
        %s1248 = smul.u32 64, %s22
        %p1249 = scmp.lt.s32.totalorder %s1248, 1023
        %s1250 = scalar_select %p1249, %s1248, 1023
        %p1251 = scmp.lt.s32.totalorder %s23, 0
        %s1252 = scalar_select %p1251, %s23, 0
        %s1253 = sadd.s32 %s1252, %s1250
        %s1254 = smul.addr %s1253, 8
        %s1255 = scalar_lea.vmem %s3, %s1254
      $region52: #{tpu_custom_call.1} parent=47 // pred_fallthru
        _
    $region48: #{tpu_custom_call.1} parent=5 // pred_fallthru
      _
  $region6: #{tpu_custom_call.1} parent=0 // loop_footer
    %s13 = sadd.s32 1, %s9
  $region7: #{tpu_custom_call.1} parent=0 // loop_footer_branch
    %8 = sbr.rel target = $region3
  $region8: #{tpu_custom_call.1} parent=0 // loop_exit
    _

</llo_original>
